<compile_context>
chip_gen: v7x
topology: tpu7x:2x2x1
jax: 0.10.0
libtpu: 0.0.40
codegen_flags: <defaults>
</compile_context>

<pallas_src>
import functools
import math

import jax
import jax.numpy as jnp
from jax.experimental import pallas as pl
from jax.experimental.pallas import tpu as pltpu


def _layernorm(x, w, b, eps=1e-5):
    mu = jnp.mean(x, axis=-1, keepdims=True)
    var = jnp.mean((x - mu) ** 2, axis=-1, keepdims=True)
    return (x - mu) * jax.lax.rsqrt(var + eps) * w + b


def _gelu_exact(x):
    # nn.GELU default = exact erf-based GELU
    return 0.5 * x * (1.0 + jax.lax.erf(x * (1.0 / math.sqrt(2.0))))


def block_kernel(
    x_ref,
    ln1w_ref, ln1b_ref,
    qkvw_ref,
    projw_ref, projb_ref,
    ln2w_ref, ln2b_ref,
    fc1w_ref, fc1b_ref,
    fc2w_ref, fc2b_ref,
    o_ref,
    *, num_heads,
):
    x = x_ref[0]                                   # (N, C) f32
    N, C = x.shape
    HD = C // num_heads
    bf16 = jnp.bfloat16

    # ---------------- norm1 + attention ----------------
    xn = _layernorm(x, ln1w_ref[0], ln1b_ref[0])   # f32 (VPU path)

    # Single big qkv matmul (softmax scale pre-folded into the q columns of the
    # weight on the host): bf16 operands, f32 accumulation on the MXU.
    qkv = jnp.dot(xn.astype(bf16), qkvw_ref[...],
                  preferred_element_type=jnp.float32)            # (N, 3C) f32
    qkv_b = qkv.astype(bf16)

    # Head-major (nh, N, HD) operands built from static lane slices + a
    # major-axis stack.  Everything stays an SSA value on the vector/XLU path —
    # no per-head masked stores into VMEM scratch and no read-back.
    def heads(base):
        return jnp.stack(
            [qkv_b[:, base + h * HD: base + (h + 1) * HD] for h in range(num_heads)],
            axis=0)

    q3 = heads(0)                                  # (nh, N, HD) bf16, pre-scaled
    k3 = heads(C)
    v3 = heads(2 * C)

    # scores / context: batched MXU contractions over all heads.
    s = jnp.einsum("hqd,hkd->hqk", q3, k3,
                   preferred_element_type=jnp.float32)           # (nh, N, N) f32
    s = s - jnp.max(s, axis=-1, keepdims=True)
    p = jnp.exp(s)
    p = p * pl.reciprocal(jnp.sum(p, axis=-1, keepdims=True), approx=True)

    ctx = jnp.einsum("hqk,hkd->hqd", p.astype(bf16), v3,
                     preferred_element_type=jnp.float32)         # (nh, N, HD) f32

    # Back to token-major (N, C) via a lane-axis concat of the per-head tiles,
    # then ONE (N, C) @ (C, C) projection matmul: full-K MXU contraction, no
    # (nh, N, C) f32 intermediate, no head-sum VPU reduction.
    ctx_b = ctx.astype(bf16)
    ctx_flat = jnp.concatenate([ctx_b[h] for h in range(num_heads)], axis=-1)  # (N, C) bf16
    y = jnp.dot(ctx_flat, projw_ref[...],
                preferred_element_type=jnp.float32) + projb_ref[0]

    x1 = x + y                                     # residual 1 (f32)

    # ---------------- norm2 + MLP ----------------
    x2n = _layernorm(x1, ln2w_ref[0], ln2b_ref[0])
    h1 = jnp.dot(x2n.astype(bf16), fc1w_ref[...],
                 preferred_element_type=jnp.float32) + fc1b_ref[0]
    h1 = _gelu_exact(h1)                           # f32 exact erf GELU
    h2 = jnp.dot(h1.astype(bf16), fc2w_ref[...],
                 preferred_element_type=jnp.float32) + fc2b_ref[0]

    o_ref[0] = x1 + h2                             # residual 2


def block_forward(x, params, *, num_heads):
    B, N, C = x.shape
    H = params["fc1_w"].shape[1]
    assert C % num_heads == 0
    HD = C // num_heads
    scale = HD ** (-0.5)

    # bf16 weights: MXU-native fast path, half the HBM->VMEM traffic & VMEM
    # residency.  The softmax scale is folded into the q columns in f32 before
    # the bf16 cast.  Biases / LayerNorm affine params stay f32.
    col_scale = jnp.concatenate(
        [jnp.full((C,), scale, jnp.float32), jnp.ones((2 * C,), jnp.float32)])
    qkv_w = (params["qkv_w"].astype(jnp.float32) * col_scale[None, :]).astype(jnp.bfloat16)
    proj_w = params["proj_w"].astype(jnp.bfloat16)              # (C, C)
    fc1_w = params["fc1_w"].astype(jnp.bfloat16)                # (C, H)
    fc2_w = params["fc2_w"].astype(jnp.bfloat16)                # (H, C)

    kernel = functools.partial(block_kernel, num_heads=num_heads)

    def const_spec(shape):
        n = len(shape)
        return pl.BlockSpec(shape, lambda b, _n=n: (0,) * _n)

    # Explicit VMEM budget: x/out tiles (2-deep pipeline), bf16 weights (default
    # double buffering, constant index maps so DMAed once), and the per-step
    # activation working set.  Clamp generation-aware (v7x has 64 MiB physical
    # VMEM per TensorCore; v5e/v6e have 128 MiB).
    tile_bytes = 2 * 2 * N * C * 4
    weight_bytes = 2 * 2 * int(qkv_w.size + proj_w.size + fc1_w.size + fc2_w.size)
    act_bytes = (4 * (N * 3 * C                      # qkv f32
                      + 2 * num_heads * N * N        # scores + probs f32
                      + N * C                        # ctx f32
                      + N * H                        # mlp hidden f32
                      + 4 * N * C)                   # xn / y / x1 / x2n f32
                 + 2 * (3 * N * C + N * C))          # bf16 q3/k3/v3 + ctx_flat
    vmem_need = 2 * (tile_bytes + weight_bytes + act_bytes)
    try:
        vmem_phys = int(pltpu.get_tpu_info().vmem_capacity_bytes)
    except Exception:
        vmem_phys = 64 * 1024 * 1024                 # conservative: v7x per-core VMEM
    vmem_cap = (vmem_phys // 8) * 7                  # headroom for compiler scratch
    vmem_limit = int(min(max(vmem_need, 32 * 1024 * 1024), vmem_cap))

    return pl.pallas_call(
        kernel,
        out_shape=jax.ShapeDtypeStruct((B, N, C), jnp.float32),
        grid=(B,),
        in_specs=[
            pl.BlockSpec((1, N, C), lambda b: (b, 0, 0)),   # x
            const_spec((1, C)),                             # ln1 weight
            const_spec((1, C)),                             # ln1 bias
            const_spec((C, 3 * C)),                         # qkv weight (bf16, q cols pre-scaled)
            const_spec((C, C)),                             # proj weight (bf16)
            const_spec((1, C)),                             # proj bias
            const_spec((1, C)),                             # ln2 weight
            const_spec((1, C)),                             # ln2 bias
            const_spec((C, H)),                             # fc1 weight (bf16)
            const_spec((1, H)),                             # fc1 bias
            const_spec((H, C)),                             # fc2 weight (bf16)
            const_spec((1, C)),                             # fc2 bias
        ],
        out_specs=pl.BlockSpec((1, N, C), lambda b: (b, 0, 0)),
        compiler_params=pltpu.CompilerParams(
            dimension_semantics=("parallel",),
            vmem_limit_bytes=vmem_limit,
        ),
    )(
        x,
        params["ln1_w"], params["ln1_b"],
        qkv_w,
        proj_w, params["proj_b"],
        params["ln2_w"], params["ln2_b"],
        fc1_w, params["fc1_b"],
        fc2_w, params["fc2_b"],
    )


# ---------------- pure-JAX reference (mirrors the PyTorch forward, f32) ----------------
def block_reference(x, params, *, num_heads):
    B, N, C = x.shape
    HD = C // num_heads
    scale = HD ** (-0.5)

    def ln(z, w, b):
        mu = jnp.mean(z, axis=-1, keepdims=True)
        var = jnp.mean((z - mu) ** 2, axis=-1, keepdims=True)
        return (z - mu) / jnp.sqrt(var + 1e-5) * w[0] + b[0]

    xn = ln(x, params["ln1_w"], params["ln1_b"])
    qkv = xn @ params["qkv_w"]                                   # (B, N, 3C)
    qkv = qkv.reshape(B, N, 3, num_heads, HD).transpose(2, 0, 3, 1, 4)
    q, k, v = qkv[0], qkv[1], qkv[2]                             # (B, nh, N, HD)
    attn = (q @ jnp.swapaxes(k, -2, -1)) * scale
    attn = jax.nn.softmax(attn, axis=-1)
    y = (attn @ v).transpose(0, 2, 1, 3).reshape(B, N, C)
    y = y @ params["proj_w"] + params["proj_b"][0]
    x = x + y
    x2n = ln(x, params["ln2_w"], params["ln2_b"])
    h = x2n @ params["fc1_w"] + params["fc1_b"][0]
    h = 0.5 * h * (1.0 + jax.lax.erf(h / math.sqrt(2.0)))
    h = h @ params["fc2_w"] + params["fc2_b"][0]
    return x + h


if __name__ == "__main__":
    B, N, C = 2, 8, 32
    num_heads = 4
    mlp_ratio = 4.0
    H = int(C * mlp_ratio)

    key = jax.random.PRNGKey(0)
    ks = jax.random.split(key, 8)

    params = {
        "ln1_w": jnp.ones((1, C), jnp.float32),
        "ln1_b": jnp.zeros((1, C), jnp.float32),
        "qkv_w": 0.05 * jax.random.normal(ks[0], (C, 3 * C), jnp.float32),
        "proj_w": 0.05 * jax.random.normal(ks[1], (C, C), jnp.float32),
        "proj_b": 0.05 * jax.random.normal(ks[2], (1, C), jnp.float32),
        "ln2_w": jnp.ones((1, C), jnp.float32),
        "ln2_b": jnp.zeros((1, C), jnp.float32),
        "fc1_w": 0.05 * jax.random.normal(ks[3], (C, H), jnp.float32),
        "fc1_b": 0.05 * jax.random.normal(ks[4], (1, H), jnp.float32),
        "fc2_w": 0.05 * jax.random.normal(ks[5], (H, C), jnp.float32),
        "fc2_b": 0.05 * jax.random.normal(ks[6], (1, C), jnp.float32),
    }

    x = jax.random.normal(ks[7], (B, N, C), jnp.float32)

    out = jax.block_until_ready(block_forward(x, params, num_heads=num_heads))
    ref = block_reference(x, params, num_heads=num_heads)

    assert out.shape == (B, N, C)
    max_err = float(jnp.max(jnp.abs(out - ref)))
    # bf16 matmul operands/weights + EUP approx reciprocal vs. pure-f32 reference.
    assert jnp.allclose(out, ref, atol=2e-2, rtol=2e-2), f"mismatch vs reference (max abs err {max_err})"

    print("KERNEL_OK")
</pallas_src>

<mosaic_0001>
module attributes {stable_mosaic.version = 11 : i64} {
  func.func @block_kernel(%arg0: i32, %arg1: memref<1x8x32xf32, #tpu.memory_space<vmem>>, %arg2: memref<1x32xf32, #tpu.memory_space<vmem>>, %arg3: memref<1x32xf32, #tpu.memory_space<vmem>>, %arg4: memref<32x96xbf16, #tpu.memory_space<vmem>>, %arg5: memref<32x32xbf16, #tpu.memory_space<vmem>>, %arg6: memref<1x32xf32, #tpu.memory_space<vmem>>, %arg7: memref<1x32xf32, #tpu.memory_space<vmem>>, %arg8: memref<1x32xf32, #tpu.memory_space<vmem>>, %arg9: memref<32x128xbf16, #tpu.memory_space<vmem>>, %arg10: memref<1x128xf32, #tpu.memory_space<vmem>>, %arg11: memref<128x32xbf16, #tpu.memory_space<vmem>>, %arg12: memref<1x32xf32, #tpu.memory_space<vmem>>, %arg13: memref<1x8x32xf32, #tpu.memory_space<vmem>>) attributes {dimension_semantics = [#tpu.dimension_semantics<parallel>], iteration_bounds = array<i64: 2>, scalar_prefetch = 0 : i64, scratch_operands = 0 : i64, tpu.core_type = #tpu.core_type<tc>, window_params = [{transform_indices = @transform_0, window_bounds = array<i64: 1, 8, 32>}, {pipeline_mode = #tpu.pipeline_mode<synchronous>, transform_indices = @transform_1, window_bounds = array<i64: 1, 32>}, {pipeline_mode = #tpu.pipeline_mode<synchronous>, transform_indices = @transform_2, window_bounds = array<i64: 1, 32>}, {pipeline_mode = #tpu.pipeline_mode<synchronous>, transform_indices = @transform_3, window_bounds = array<i64: 32, 96>}, {pipeline_mode = #tpu.pipeline_mode<synchronous>, transform_indices = @transform_4, window_bounds = array<i64: 32, 32>}, {pipeline_mode = #tpu.pipeline_mode<synchronous>, transform_indices = @transform_5, window_bounds = array<i64: 1, 32>}, {pipeline_mode = #tpu.pipeline_mode<synchronous>, transform_indices = @transform_6, window_bounds = array<i64: 1, 32>}, {pipeline_mode = #tpu.pipeline_mode<synchronous>, transform_indices = @transform_7, window_bounds = array<i64: 1, 32>}, {pipeline_mode = #tpu.pipeline_mode<synchronous>, transform_indices = @transform_8, window_bounds = array<i64: 32, 128>}, {pipeline_mode = #tpu.pipeline_mode<synchronous>, transform_indices = @transform_9, window_bounds = array<i64: 1, 128>}, {pipeline_mode = #tpu.pipeline_mode<synchronous>, transform_indices = @transform_10, window_bounds = array<i64: 128, 32>}, {pipeline_mode = #tpu.pipeline_mode<synchronous>, transform_indices = @transform_11, window_bounds = array<i64: 1, 32>}, {transform_indices = @transform_12, window_bounds = array<i64: 1, 8, 32>}]} {
    %c0 = arith.constant 0 : index
    %c0_0 = arith.constant 0 : index
    %c0_1 = arith.constant 0 : index
    %0 = vector.load %arg1[%c0, %c0_0, %c0_1] : memref<1x8x32xf32, #tpu.memory_space<vmem>>, vector<1x8x32xf32>
    %1 = vector.shape_cast %0 : vector<1x8x32xf32> to vector<8x32xf32>
    %c0_2 = arith.constant 0 : index
    %c0_3 = arith.constant 0 : index
    %2 = vector.load %arg2[%c0_2, %c0_3] : memref<1x32xf32, #tpu.memory_space<vmem>>, vector<1x32xf32>
    %3 = vector.shape_cast %2 : vector<1x32xf32> to vector<32xf32>
    %c0_4 = arith.constant 0 : index
    %c0_5 = arith.constant 0 : index
    %4 = vector.load %arg3[%c0_4, %c0_5] : memref<1x32xf32, #tpu.memory_space<vmem>>, vector<1x32xf32>
    %5 = vector.shape_cast %4 : vector<1x32xf32> to vector<32xf32>
    %cst = arith.constant dense<0.000000e+00> : vector<8xf32>
    %6 = vector.multi_reduction <add>, %1, %cst [1] : vector<8x32xf32> to vector<8xf32>
    %7 = vector.shape_cast %6 : vector<8xf32> to vector<8x1xf32>
    %cst_6 = arith.constant 3.200000e+01 : f32
    %8 = vector.broadcast %cst_6 : f32 to vector<8x1xf32>
    %9 = arith.divf %7, %8 : vector<8x1xf32>
    %10 = vector.broadcast %9 : vector<8x1xf32> to vector<8x32xf32>
    %11 = arith.subf %1, %10 : vector<8x32xf32>
    %12 = arith.mulf %11, %11 : vector<8x32xf32>
    %cst_7 = arith.constant dense<0.000000e+00> : vector<8xf32>
    %13 = vector.multi_reduction <add>, %12, %cst_7 [1] : vector<8x32xf32> to vector<8xf32>
    %14 = vector.shape_cast %13 : vector<8xf32> to vector<8x1xf32>
    %cst_8 = arith.constant 3.200000e+01 : f32
    %15 = vector.broadcast %cst_8 : f32 to vector<8x1xf32>
    %16 = arith.divf %14, %15 : vector<8x1xf32>
    %17 = vector.broadcast %9 : vector<8x1xf32> to vector<8x32xf32>
    %18 = arith.subf %1, %17 : vector<8x32xf32>
    %cst_9 = arith.constant 9.99999974E-6 : f32
    %19 = vector.broadcast %cst_9 : f32 to vector<8x1xf32>
    %20 = arith.addf %16, %19 : vector<8x1xf32>
    %21 = math.rsqrt %20 : vector<8x1xf32>
    %22 = vector.broadcast %21 : vector<8x1xf32> to vector<8x32xf32>
    %23 = arith.mulf %18, %22 : vector<8x32xf32>
    %24 = vector.shape_cast %3 : vector<32xf32> to vector<1x32xf32>
    %25 = vector.broadcast %24 : vector<1x32xf32> to vector<8x32xf32>
    %26 = arith.mulf %23, %25 : vector<8x32xf32>
    %27 = vector.shape_cast %5 : vector<32xf32> to vector<1x32xf32>
    %28 = vector.broadcast %27 : vector<1x32xf32> to vector<8x32xf32>
    %29 = arith.addf %26, %28 : vector<8x32xf32>
    %30 = arith.truncf %29 : vector<8x32xf32> to vector<8x32xbf16>
    %c0_10 = arith.constant 0 : index
    %c0_11 = arith.constant 0 : index
    %31 = vector.load %arg4[%c0_10, %c0_11] : memref<32x96xbf16, #tpu.memory_space<vmem>>, vector<32x96xbf16>
    %cst_12 = arith.constant dense<0.000000e+00> : vector<8x96xf32>
    %32 = tpu.matmul %30, %31, %cst_12 {dimension_numbers = #tpu.dot_dimension_numbers<[1], [0], [0], [1], [0, 0, 1, 1], [], []>} : vector<8x32xbf16>, vector<32x96xbf16>, vector<8x96xf32> -> vector<8x96xf32>
    %33 = arith.truncf %32 : vector<8x96xf32> to vector<8x96xbf16>
    %34 = vector.extract_strided_slice %33 {offsets = [0, 0], sizes = [8, 8], strides = [1, 1]} : vector<8x96xbf16> to vector<8x8xbf16>
    %35 = vector.extract_strided_slice %33 {offsets = [0, 8], sizes = [8, 8], strides = [1, 1]} : vector<8x96xbf16> to vector<8x8xbf16>
    %36 = vector.extract_strided_slice %33 {offsets = [0, 16], sizes = [8, 8], strides = [1, 1]} : vector<8x96xbf16> to vector<8x8xbf16>
    %37 = vector.extract_strided_slice %33 {offsets = [0, 24], sizes = [8, 8], strides = [1, 1]} : vector<8x96xbf16> to vector<8x8xbf16>
    %38 = vector.shape_cast %34 : vector<8x8xbf16> to vector<1x8x8xbf16>
    %39 = vector.shape_cast %35 : vector<8x8xbf16> to vector<1x8x8xbf16>
    %40 = vector.shape_cast %36 : vector<8x8xbf16> to vector<1x8x8xbf16>
    %41 = vector.shape_cast %37 : vector<8x8xbf16> to vector<1x8x8xbf16>
    %42 = tpu.concatenate %38, %39, %40, %41 in 0 : vector<1x8x8xbf16>, vector<1x8x8xbf16>, vector<1x8x8xbf16>, vector<1x8x8xbf16> -> vector<4x8x8xbf16>
    %43 = vector.extract_strided_slice %33 {offsets = [0, 32], sizes = [8, 8], strides = [1, 1]} : vector<8x96xbf16> to vector<8x8xbf16>
    %44 = vector.extract_strided_slice %33 {offsets = [0, 40], sizes = [8, 8], strides = [1, 1]} : vector<8x96xbf16> to vector<8x8xbf16>
    %45 = vector.extract_strided_slice %33 {offsets = [0, 48], sizes = [8, 8], strides = [1, 1]} : vector<8x96xbf16> to vector<8x8xbf16>
    %46 = vector.extract_strided_slice %33 {offsets = [0, 56], sizes = [8, 8], strides = [1, 1]} : vector<8x96xbf16> to vector<8x8xbf16>
    %47 = vector.shape_cast %43 : vector<8x8xbf16> to vector<1x8x8xbf16>
    %48 = vector.shape_cast %44 : vector<8x8xbf16> to vector<1x8x8xbf16>
    %49 = vector.shape_cast %45 : vector<8x8xbf16> to vector<1x8x8xbf16>
    %50 = vector.shape_cast %46 : vector<8x8xbf16> to vector<1x8x8xbf16>
    %51 = tpu.concatenate %47, %48, %49, %50 in 0 : vector<1x8x8xbf16>, vector<1x8x8xbf16>, vector<1x8x8xbf16>, vector<1x8x8xbf16> -> vector<4x8x8xbf16>
    %52 = vector.extract_strided_slice %33 {offsets = [0, 64], sizes = [8, 8], strides = [1, 1]} : vector<8x96xbf16> to vector<8x8xbf16>
    %53 = vector.extract_strided_slice %33 {offsets = [0, 72], sizes = [8, 8], strides = [1, 1]} : vector<8x96xbf16> to vector<8x8xbf16>
    %54 = vector.extract_strided_slice %33 {offsets = [0, 80], sizes = [8, 8], strides = [1, 1]} : vector<8x96xbf16> to vector<8x8xbf16>
    %55 = vector.extract_strided_slice %33 {offsets = [0, 88], sizes = [8, 8], strides = [1, 1]} : vector<8x96xbf16> to vector<8x8xbf16>
    %56 = vector.shape_cast %52 : vector<8x8xbf16> to vector<1x8x8xbf16>
    %57 = vector.shape_cast %53 : vector<8x8xbf16> to vector<1x8x8xbf16>
    %58 = vector.shape_cast %54 : vector<8x8xbf16> to vector<1x8x8xbf16>
    %59 = vector.shape_cast %55 : vector<8x8xbf16> to vector<1x8x8xbf16>
    %60 = tpu.concatenate %56, %57, %58, %59 in 0 : vector<1x8x8xbf16>, vector<1x8x8xbf16>, vector<1x8x8xbf16>, vector<1x8x8xbf16> -> vector<4x8x8xbf16>
    "tpu.trace_start"() <{level = 10 : i32, message = "hqd,hkd->hqk"}> : () -> ()
    %cst_13 = arith.constant dense<0.000000e+00> : vector<4x8x8xf32>
    %61 = tpu.matmul %42, %51, %cst_13 {dimension_numbers = #tpu.dot_dimension_numbers<[2], [2], [1], [1], [0, 0, 0, 1, 1, 1], [0], [0]>} : vector<4x8x8xbf16>, vector<4x8x8xbf16>, vector<4x8x8xf32> -> vector<4x8x8xf32>
    "tpu.trace_stop"() : () -> ()
    %cst_14 = arith.constant dense<0xFF800000> : vector<4x8xf32>
    %62 = vector.multi_reduction <maximumf>, %61, %cst_14 [2] : vector<4x8x8xf32> to vector<4x8xf32>
    %63 = vector.shape_cast %62 : vector<4x8xf32> to vector<4x8x1xf32>
    %64 = vector.broadcast %63 : vector<4x8x1xf32> to vector<4x8x8xf32>
    %65 = arith.subf %61, %64 : vector<4x8x8xf32>
    %66 = math.exp %65 : vector<4x8x8xf32>
    %cst_15 = arith.constant dense<0.000000e+00> : vector<4x8xf32>
    %67 = vector.multi_reduction <add>, %66, %cst_15 [2] : vector<4x8x8xf32> to vector<4x8xf32>
    %68 = vector.shape_cast %67 : vector<4x8xf32> to vector<4x8x1xf32>
    %69 = tpu.reciprocal %68 {approx = true} : vector<4x8x1xf32> -> vector<4x8x1xf32>
    %70 = vector.broadcast %69 : vector<4x8x1xf32> to vector<4x8x8xf32>
    %71 = arith.mulf %66, %70 : vector<4x8x8xf32>
    %72 = arith.truncf %71 : vector<4x8x8xf32> to vector<4x8x8xbf16>
    "tpu.trace_start"() <{level = 10 : i32, message = "hqk,hkd->hqd"}> : () -> ()
    %cst_16 = arith.constant dense<0.000000e+00> : vector<4x8x8xf32>
    %73 = tpu.matmul %72, %60, %cst_16 {dimension_numbers = #tpu.dot_dimension_numbers<[2], [1], [1], [2], [0, 0, 0, 1, 1, 2], [0], [0]>} : vector<4x8x8xbf16>, vector<4x8x8xbf16>, vector<4x8x8xf32> -> vector<4x8x8xf32>
    "tpu.trace_stop"() : () -> ()
    %74 = arith.truncf %73 : vector<4x8x8xf32> to vector<4x8x8xbf16>
    %75 = vector.extract_strided_slice %74 {offsets = [0, 0, 0], sizes = [1, 8, 8], strides = [1, 1, 1]} : vector<4x8x8xbf16> to vector<1x8x8xbf16>
    %76 = vector.shape_cast %75 : vector<1x8x8xbf16> to vector<8x8xbf16>
    %77 = vector.extract_strided_slice %74 {offsets = [1, 0, 0], sizes = [1, 8, 8], strides = [1, 1, 1]} : vector<4x8x8xbf16> to vector<1x8x8xbf16>
    %78 = vector.shape_cast %77 : vector<1x8x8xbf16> to vector<8x8xbf16>
    %79 = vector.extract_strided_slice %74 {offsets = [2, 0, 0], sizes = [1, 8, 8], strides = [1, 1, 1]} : vector<4x8x8xbf16> to vector<1x8x8xbf16>
    %80 = vector.shape_cast %79 : vector<1x8x8xbf16> to vector<8x8xbf16>
    %81 = vector.extract_strided_slice %74 {offsets = [3, 0, 0], sizes = [1, 8, 8], strides = [1, 1, 1]} : vector<4x8x8xbf16> to vector<1x8x8xbf16>
    %82 = vector.shape_cast %81 : vector<1x8x8xbf16> to vector<8x8xbf16>
    %83 = tpu.concatenate %76, %78, %80, %82 in 1 : vector<8x8xbf16>, vector<8x8xbf16>, vector<8x8xbf16>, vector<8x8xbf16> -> vector<8x32xbf16>
    %c0_17 = arith.constant 0 : index
    %c0_18 = arith.constant 0 : index
    %84 = vector.load %arg5[%c0_17, %c0_18] : memref<32x32xbf16, #tpu.memory_space<vmem>>, vector<32x32xbf16>
    %cst_19 = arith.constant dense<0.000000e+00> : vector<8x32xf32>
    %85 = tpu.matmul %83, %84, %cst_19 {dimension_numbers = #tpu.dot_dimension_numbers<[1], [0], [0], [1], [0, 0, 1, 1], [], []>} : vector<8x32xbf16>, vector<32x32xbf16>, vector<8x32xf32> -> vector<8x32xf32>
    %c0_20 = arith.constant 0 : index
    %c0_21 = arith.constant 0 : index
    %86 = vector.load %arg6[%c0_20, %c0_21] : memref<1x32xf32, #tpu.memory_space<vmem>>, vector<1x32xf32>
    %87 = vector.shape_cast %86 : vector<1x32xf32> to vector<32xf32>
    %88 = vector.shape_cast %87 : vector<32xf32> to vector<1x32xf32>
    %89 = vector.broadcast %88 : vector<1x32xf32> to vector<8x32xf32>
    %90 = arith.addf %85, %89 : vector<8x32xf32>
    %91 = arith.addf %1, %90 : vector<8x32xf32>
    %c0_22 = arith.constant 0 : index
    %c0_23 = arith.constant 0 : index
    %92 = vector.load %arg7[%c0_22, %c0_23] : memref<1x32xf32, #tpu.memory_space<vmem>>, vector<1x32xf32>
    %93 = vector.shape_cast %92 : vector<1x32xf32> to vector<32xf32>
    %c0_24 = arith.constant 0 : index
    %c0_25 = arith.constant 0 : index
    %94 = vector.load %arg8[%c0_24, %c0_25] : memref<1x32xf32, #tpu.memory_space<vmem>>, vector<1x32xf32>
    %95 = vector.shape_cast %94 : vector<1x32xf32> to vector<32xf32>
    %cst_26 = arith.constant dense<0.000000e+00> : vector<8xf32>
    %96 = vector.multi_reduction <add>, %91, %cst_26 [1] : vector<8x32xf32> to vector<8xf32>
    %97 = vector.shape_cast %96 : vector<8xf32> to vector<8x1xf32>
    %cst_27 = arith.constant 3.200000e+01 : f32
    %98 = vector.broadcast %cst_27 : f32 to vector<8x1xf32>
    %99 = arith.divf %97, %98 : vector<8x1xf32>
    %100 = vector.broadcast %99 : vector<8x1xf32> to vector<8x32xf32>
    %101 = arith.subf %91, %100 : vector<8x32xf32>
    %102 = arith.mulf %101, %101 : vector<8x32xf32>
    %cst_28 = arith.constant dense<0.000000e+00> : vector<8xf32>
    %103 = vector.multi_reduction <add>, %102, %cst_28 [1] : vector<8x32xf32> to vector<8xf32>
    %104 = vector.shape_cast %103 : vector<8xf32> to vector<8x1xf32>
    %cst_29 = arith.constant 3.200000e+01 : f32
    %105 = vector.broadcast %cst_29 : f32 to vector<8x1xf32>
    %106 = arith.divf %104, %105 : vector<8x1xf32>
    %107 = vector.broadcast %99 : vector<8x1xf32> to vector<8x32xf32>
    %108 = arith.subf %91, %107 : vector<8x32xf32>
    %cst_30 = arith.constant 9.99999974E-6 : f32
    %109 = vector.broadcast %cst_30 : f32 to vector<8x1xf32>
    %110 = arith.addf %106, %109 : vector<8x1xf32>
    %111 = math.rsqrt %110 : vector<8x1xf32>
    %112 = vector.broadcast %111 : vector<8x1xf32> to vector<8x32xf32>
    %113 = arith.mulf %108, %112 : vector<8x32xf32>
    %114 = vector.shape_cast %93 : vector<32xf32> to vector<1x32xf32>
    %115 = vector.broadcast %114 : vector<1x32xf32> to vector<8x32xf32>
    %116 = arith.mulf %113, %115 : vector<8x32xf32>
    %117 = vector.shape_cast %95 : vector<32xf32> to vector<1x32xf32>
    %118 = vector.broadcast %117 : vector<1x32xf32> to vector<8x32xf32>
    %119 = arith.addf %116, %118 : vector<8x32xf32>
    %120 = arith.truncf %119 : vector<8x32xf32> to vector<8x32xbf16>
    %c0_31 = arith.constant 0 : index
    %c0_32 = arith.constant 0 : index
    %121 = vector.load %arg9[%c0_31, %c0_32] : memref<32x128xbf16, #tpu.memory_space<vmem>>, vector<32x128xbf16>
    %cst_33 = arith.constant dense<0.000000e+00> : vector<8x128xf32>
    %122 = tpu.matmul %120, %121, %cst_33 {dimension_numbers = #tpu.dot_dimension_numbers<[1], [0], [0], [1], [0, 0, 1, 1], [], []>} : vector<8x32xbf16>, vector<32x128xbf16>, vector<8x128xf32> -> vector<8x128xf32>
    %c0_34 = arith.constant 0 : index
    %c0_35 = arith.constant 0 : index
    %123 = vector.load %arg10[%c0_34, %c0_35] : memref<1x128xf32, #tpu.memory_space<vmem>>, vector<1x128xf32>
    %124 = vector.shape_cast %123 : vector<1x128xf32> to vector<128xf32>
    %125 = vector.shape_cast %124 : vector<128xf32> to vector<1x128xf32>
    %126 = vector.broadcast %125 : vector<1x128xf32> to vector<8x128xf32>
    %127 = arith.addf %122, %126 : vector<8x128xf32>
    %cst_36 = arith.constant 5.000000e-01 : f32
    %128 = vector.broadcast %cst_36 : f32 to vector<8x128xf32>
    %129 = arith.mulf %128, %127 : vector<8x128xf32>
    %cst_37 = arith.constant 0.707106769 : f32
    %130 = vector.broadcast %cst_37 : f32 to vector<8x128xf32>
    %131 = arith.mulf %127, %130 : vector<8x128xf32>
    %132 = math.erf %131 : vector<8x128xf32>
    %cst_38 = arith.constant 1.000000e+00 : f32
    %133 = vector.broadcast %cst_38 : f32 to vector<8x128xf32>
    %134 = arith.addf %133, %132 : vector<8x128xf32>
    %135 = arith.mulf %129, %134 : vector<8x128xf32>
    %136 = arith.truncf %135 : vector<8x128xf32> to vector<8x128xbf16>
    %c0_39 = arith.constant 0 : index
    %c0_40 = arith.constant 0 : index
    %137 = vector.load %arg11[%c0_39, %c0_40] : memref<128x32xbf16, #tpu.memory_space<vmem>>, vector<128x32xbf16>
    %cst_41 = arith.constant dense<0.000000e+00> : vector<8x32xf32>
    %138 = tpu.matmul %136, %137, %cst_41 {dimension_numbers = #tpu.dot_dimension_numbers<[1], [0], [0], [1], [0, 0, 1, 1], [], []>} : vector<8x128xbf16>, vector<128x32xbf16>, vector<8x32xf32> -> vector<8x32xf32>
    %c0_42 = arith.constant 0 : index
    %c0_43 = arith.constant 0 : index
    %139 = vector.load %arg12[%c0_42, %c0_43] : memref<1x32xf32, #tpu.memory_space<vmem>>, vector<1x32xf32>
    %140 = vector.shape_cast %139 : vector<1x32xf32> to vector<32xf32>
    %141 = vector.shape_cast %140 : vector<32xf32> to vector<1x32xf32>
    %142 = vector.broadcast %141 : vector<1x32xf32> to vector<8x32xf32>
    %143 = arith.addf %138, %142 : vector<8x32xf32>
    %144 = arith.addf %91, %143 : vector<8x32xf32>
    %c0_44 = arith.constant 0 : index
    %c0_45 = arith.constant 0 : index
    %c0_46 = arith.constant 0 : index
    %145 = vector.load %arg13[%c0_44, %c0_45, %c0_46] : memref<1x8x32xf32, #tpu.memory_space<vmem>>, vector<1x8x32xf32>
    %146 = vector.shape_cast %145 : vector<1x8x32xf32> to vector<8x32xf32>
    %147 = vector.shape_cast %144 : vector<8x32xf32> to vector<1x8x32xf32>
    tpu.vector_store %arg13[%c0_44, %c0_45, %c0_46], %147 {strides = array<i32>} : memref<1x8x32xf32, #tpu.memory_space<vmem>>, vector<1x8x32xf32>,
    return
  }
  func.func @transform_0(%arg0: i32) -> (i32, i32, i32) {
    %c0_i32 = arith.constant 0 : i32
    %c0_i32_0 = arith.constant 0 : i32
    %c0_i32_1 = arith.constant 0 : i32
    return %arg0, %c0_i32, %c0_i32_0 : i32, i32, i32
  }
  func.func @transform_1(%arg0: i32) -> (i32, i32) {
    %c0_i32 = arith.constant 0 : i32
    %c0_i32_0 = arith.constant 0 : i32
    %c0_i32_1 = arith.constant 0 : i32
    return %c0_i32, %c0_i32_0 : i32, i32
  }
  func.func @transform_2(%arg0: i32) -> (i32, i32) {
    %c0_i32 = arith.constant 0 : i32
    %c0_i32_0 = arith.constant 0 : i32
    %c0_i32_1 = arith.constant 0 : i32
    return %c0_i32, %c0_i32_0 : i32, i32
  }
  func.func @transform_3(%arg0: i32) -> (i32, i32) {
    %c0_i32 = arith.constant 0 : i32
    %c0_i32_0 = arith.constant 0 : i32
    %c0_i32_1 = arith.constant 0 : i32
    return %c0_i32, %c0_i32_0 : i32, i32
  }
  func.func @transform_4(%arg0: i32) -> (i32, i32) {
    %c0_i32 = arith.constant 0 : i32
    %c0_i32_0 = arith.constant 0 : i32
    %c0_i32_1 = arith.constant 0 : i32
    return %c0_i32, %c0_i32_0 : i32, i32
  }
  func.func @transform_5(%arg0: i32) -> (i32, i32) {
    %c0_i32 = arith.constant 0 : i32
    %c0_i32_0 = arith.constant 0 : i32
    %c0_i32_1 = arith.constant 0 : i32
    return %c0_i32, %c0_i32_0 : i32, i32
  }
  func.func @transform_6(%arg0: i32) -> (i32, i32) {
    %c0_i32 = arith.constant 0 : i32
    %c0_i32_0 = arith.constant 0 : i32
    %c0_i32_1 = arith.constant 0 : i32
    return %c0_i32, %c0_i32_0 : i32, i32
  }
  func.func @transform_7(%arg0: i32) -> (i32, i32) {
    %c0_i32 = arith.constant 0 : i32
    %c0_i32_0 = arith.constant 0 : i32
    %c0_i32_1 = arith.constant 0 : i32
    return %c0_i32, %c0_i32_0 : i32, i32
  }
  func.func @transform_8(%arg0: i32) -> (i32, i32) {
    %c0_i32 = arith.constant 0 : i32
    %c0_i32_0 = arith.constant 0 : i32
    %c0_i32_1 = arith.constant 0 : i32
    return %c0_i32, %c0_i32_0 : i32, i32
  }
  func.func @transform_9(%arg0: i32) -> (i32, i32) {
    %c0_i32 = arith.constant 0 : i32
    %c0_i32_0 = arith.constant 0 : i32
    %c0_i32_1 = arith.constant 0 : i32
    return %c0_i32, %c0_i32_0 : i32, i32
  }
  func.func @transform_10(%arg0: i32) -> (i32, i32) {
    %c0_i32 = arith.constant 0 : i32
    %c0_i32_0 = arith.constant 0 : i32
    %c0_i32_1 = arith.constant 0 : i32
    return %c0_i32, %c0_i32_0 : i32, i32
  }
  func.func @transform_11(%arg0: i32) -> (i32, i32) {
    %c0_i32 = arith.constant 0 : i32
    %c0_i32_0 = arith.constant 0 : i32
    %c0_i32_1 = arith.constant 0 : i32
    return %c0_i32, %c0_i32_0 : i32, i32
  }
  func.func @transform_12(%arg0: i32) -> (i32, i32, i32) {
    %c0_i32 = arith.constant 0 : i32
    %c0_i32_0 = arith.constant 0 : i32
    %c0_i32_1 = arith.constant 0 : i32
    return %arg0, %c0_i32, %c0_i32_0 : i32, i32, i32
  }
}

</mosaic_0001>

<llo_original>
// kernel: tpu_custom_call.1
$region0: #{tpu_custom_call.1}
  #allocation0 [shape = 'u32[]', space=smem, size = 0x4, offset = 0x4, fixed_abs, tag = 'smem constant byte address 0x4 - core index']
  #allocation1 [shape = 'u32[144,128]{1,0:T(1,128)}', space=vmem, size = 0x12000, scoped, tag = 'internal scratch']
  %s0 = inlined_call_operand.vmem [shape: f32[2,8,32], index: 0, kind: input, shape index: {}]
  %s1 = inlined_call_operand.vmem [shape: f32[1,32], index: 1, kind: input, shape index: {}]
  %s2 = inlined_call_operand.vmem [shape: f32[1,32], index: 2, kind: input, shape index: {}]
  %s3 = inlined_call_operand.vmem [shape: bf16[32,96], index: 3, kind: input, shape index: {}]
  %s4 = inlined_call_operand.vmem [shape: bf16[32,32], index: 4, kind: input, shape index: {}]
  %s5 = inlined_call_operand.vmem [shape: f32[1,32], index: 5, kind: input, shape index: {}]
  %s6 = inlined_call_operand.vmem [shape: f32[1,32], index: 6, kind: input, shape index: {}]
  %s7 = inlined_call_operand.vmem [shape: f32[1,32], index: 7, kind: input, shape index: {}]
  %s8 = inlined_call_operand.vmem [shape: bf16[32,128], index: 8, kind: input, shape index: {}]
  %s9 = inlined_call_operand.vmem [shape: f32[1,128], index: 9, kind: input, shape index: {}]
  %s10 = inlined_call_operand.vmem [shape: bf16[128,32], index: 10, kind: input, shape index: {}]
  %s11 = inlined_call_operand.vmem [shape: f32[1,32], index: 11, kind: input, shape index: {}]
  %s12 = inlined_call_operand.hbm [shape: f32[2,8,32], index: 12, kind: output, shape index: {}]
  %s13 = sld [smem:[#allocation0]]
  $region81: #{tpu_custom_call.1} parent=0
    _
  %s15 = ssub.s32 1, %s13
  %s16 = scalar_select 0, %s15, %s13
  $region1: #{tpu_custom_call.1} parent=0
    #allocation2 [shape = 'u8[8192]{0}', space=vmem, size = 0x2000, scoped, tag = 'output window, operand 0']
    #allocation3 [shape = 's32[2]{0}', space=sflag, size = 0x8, scoped, tag = 'scoped memory for tpu_custom_call.1']
    %17 = vsyncpa [#allocation3], 0
    %s18 = scalar_lea.sflag [#allocation3], 1
    %19 = vsyncpa %s18, 0
    loop: start=0, step=1, limit=4
    $region2: #{tpu_custom_call.1} parent=1 // loop_pre_header
      _
    $region3: #{tpu_custom_call.1} parent=1 // loop_header
      %s21 = sphi 0, %s25
      %p22 = scmp.ge.s32.totalorder %s21, 4
      %s31 = sphi 0, %s33
      %s34 = sphi 0, %s31
      %s35 = sphi 0, %s34
      %s51 = sphi 0, %s35
      %s55 = sphi 0, %s55
      %s57 = sphi 0, %s55
      %s58 = sphi 0, %s57
      %s72 = sphi 0, %s58
      %s76 = sphi 0, %s76
      %s78 = sphi 0, %s76
      %s79 = sphi 0, %s78
      %s93 = sphi 0, %s79
      %s97 = sphi 0, %s97
      %s99 = sphi 0, %s97
      %s100 = sphi 0, %s99
      %s114 = sphi 0, %s100
      %s118 = sphi 0, %s118
      %s120 = sphi 0, %s118
      %s121 = sphi 0, %s120
      %s135 = sphi 0, %s121
      %s139 = sphi 0, %s139
      %s141 = sphi 0, %s139
      %s142 = sphi 0, %s141
      %s156 = sphi 0, %s142
      %s160 = sphi 0, %s160
      %s162 = sphi 0, %s160
      %s163 = sphi 0, %s162
      %s177 = sphi 0, %s163
      %s181 = sphi 0, %s181
      %s183 = sphi 0, %s181
      %s184 = sphi 0, %s183
      %s198 = sphi 0, %s184
      %s202 = sphi 0, %s202
      %s204 = sphi 0, %s202
      %s205 = sphi 0, %s204
      %s219 = sphi 0, %s205
      %s223 = sphi 0, %s223
      %s225 = sphi 0, %s223
      %s226 = sphi 0, %s225
      %s240 = sphi 0, %s226
      %s244 = sphi 0, %s244
      %s246 = sphi 0, %s244
      %s247 = sphi 0, %s246
      %s261 = sphi 0, %s247
      %s265 = sphi 0, %s265
      %s267 = sphi 0, %s265
      %s268 = sphi 0, %s267
      %s282 = sphi 0, %s268
      %s288 = sphi 0, %s290
      %s291 = sphi 0, %s288
      %s292 = sphi 0, %s291
      %s308 = sphi 0, %s292
    $region4: #{tpu_custom_call.1} parent=1 // loop_header_branch
      %24 = sbr.rel (%p22) target = $region8
    $region5: #{tpu_custom_call.1} parent=1 // loop_body
      %s26 = ssub.s32 %s21, 1
      %s27 = ssub.s32 %s21, 2
      %s28 = sadd.s32 %s21, 1
      %s29 = ssub.s32 %s21, %s28
      %p30 = scmp.eq.s32.totalorder %s29, 0
      %s32 = sadd.s32 %s31, 1
      %s33 = scalar_select %p30, %s31, %s32
      %p36 = pneg %p30
      %p37 = scmp.eq.s32.totalorder %s21, 1
      %p38 = por %p36, %p37
      %p39 = scmp.ne.s32.totalorder %s31, %s34
      %p40 = scmp.eq.s32.totalorder %s21, 0
      %p41 = por %p39, %p40
      %p42 = scmp.ne.s32.totalorder %s31, %s34
      %p43 = scmp.eq.s32.totalorder %s26, 1
      %p44 = por %p42, %p43
      %p45 = scmp.ne.s32.totalorder %s34, %s35
      %p46 = scmp.eq.s32.totalorder %s26, 0
      %p47 = por %p45, %p46
      %p48 = scmp.ne.s32.totalorder %s34, %s35
      %p49 = scmp.eq.s32.totalorder %s27, 1
      %p50 = por %p48, %p49
      %p52 = scmp.ne.s32.totalorder %s35, %s51
      %p53 = scmp.eq.s32.totalorder %s27, 0
      %p54 = por %p52, %p53
      %s56 = sadd.s32 %s55, 1
      %p59 = scmp.eq.s32.totalorder %s21, 1
      %p60 = scmp.ne.s32.totalorder %s55, %s57
      %p61 = scmp.eq.s32.totalorder %s21, 0
      %p62 = por %p60, %p61
      %p63 = scmp.ne.s32.totalorder %s55, %s57
      %p64 = scmp.eq.s32.totalorder %s26, 1
      %p65 = por %p63, %p64
      %p66 = scmp.ne.s32.totalorder %s57, %s58
      %p67 = scmp.eq.s32.totalorder %s26, 0
      %p68 = por %p66, %p67
      %p69 = scmp.ne.s32.totalorder %s57, %s58
      %p70 = scmp.eq.s32.totalorder %s27, 1
      %p71 = por %p69, %p70
      %p73 = scmp.ne.s32.totalorder %s58, %s72
      %p74 = scmp.eq.s32.totalorder %s27, 0
      %p75 = por %p73, %p74
      %s77 = sadd.s32 %s76, 1
      %p80 = scmp.eq.s32.totalorder %s21, 1
      %p81 = scmp.ne.s32.totalorder %s76, %s78
      %p82 = scmp.eq.s32.totalorder %s21, 0
      %p83 = por %p81, %p82
      %p84 = scmp.ne.s32.totalorder %s76, %s78
      %p85 = scmp.eq.s32.totalorder %s26, 1
      %p86 = por %p84, %p85
      %p87 = scmp.ne.s32.totalorder %s78, %s79
      %p88 = scmp.eq.s32.totalorder %s26, 0
      %p89 = por %p87, %p88
      %p90 = scmp.ne.s32.totalorder %s78, %s79
      %p91 = scmp.eq.s32.totalorder %s27, 1
      %p92 = por %p90, %p91
      %p94 = scmp.ne.s32.totalorder %s79, %s93
      %p95 = scmp.eq.s32.totalorder %s27, 0
      %p96 = por %p94, %p95
      %s98 = sadd.s32 %s97, 1
      %p101 = scmp.eq.s32.totalorder %s21, 1
      %p102 = scmp.ne.s32.totalorder %s97, %s99
      %p103 = scmp.eq.s32.totalorder %s21, 0
      %p104 = por %p102, %p103
      %p105 = scmp.ne.s32.totalorder %s97, %s99
      %p106 = scmp.eq.s32.totalorder %s26, 1
      %p107 = por %p105, %p106
      %p108 = scmp.ne.s32.totalorder %s99, %s100
      %p109 = scmp.eq.s32.totalorder %s26, 0
      %p110 = por %p108, %p109
      %p111 = scmp.ne.s32.totalorder %s99, %s100
      %p112 = scmp.eq.s32.totalorder %s27, 1
      %p113 = por %p111, %p112
      %p115 = scmp.ne.s32.totalorder %s100, %s114
      %p116 = scmp.eq.s32.totalorder %s27, 0
      %p117 = por %p115, %p116
      %s119 = sadd.s32 %s118, 1
      %p122 = scmp.eq.s32.totalorder %s21, 1
      %p123 = scmp.ne.s32.totalorder %s118, %s120
      %p124 = scmp.eq.s32.totalorder %s21, 0
      %p125 = por %p123, %p124
      %p126 = scmp.ne.s32.totalorder %s118, %s120
      %p127 = scmp.eq.s32.totalorder %s26, 1
      %p128 = por %p126, %p127
      %p129 = scmp.ne.s32.totalorder %s120, %s121
      %p130 = scmp.eq.s32.totalorder %s26, 0
      %p131 = por %p129, %p130
      %p132 = scmp.ne.s32.totalorder %s120, %s121
      %p133 = scmp.eq.s32.totalorder %s27, 1
      %p134 = por %p132, %p133
      %p136 = scmp.ne.s32.totalorder %s121, %s135
      %p137 = scmp.eq.s32.totalorder %s27, 0
      %p138 = por %p136, %p137
      %s140 = sadd.s32 %s139, 1
      %p143 = scmp.eq.s32.totalorder %s21, 1
      %p144 = scmp.ne.s32.totalorder %s139, %s141
      %p145 = scmp.eq.s32.totalorder %s21, 0
      %p146 = por %p144, %p145
      %p147 = scmp.ne.s32.totalorder %s139, %s141
      %p148 = scmp.eq.s32.totalorder %s26, 1
      %p149 = por %p147, %p148
      %p150 = scmp.ne.s32.totalorder %s141, %s142
      %p151 = scmp.eq.s32.totalorder %s26, 0
      %p152 = por %p150, %p151
      %p153 = scmp.ne.s32.totalorder %s141, %s142
      %p154 = scmp.eq.s32.totalorder %s27, 1
      %p155 = por %p153, %p154
      %p157 = scmp.ne.s32.totalorder %s142, %s156
      %p158 = scmp.eq.s32.totalorder %s27, 0
      %p159 = por %p157, %p158
      %s161 = sadd.s32 %s160, 1
      %p164 = scmp.eq.s32.totalorder %s21, 1
      %p165 = scmp.ne.s32.totalorder %s160, %s162
      %p166 = scmp.eq.s32.totalorder %s21, 0
      %p167 = por %p165, %p166
      %p168 = scmp.ne.s32.totalorder %s160, %s162
      %p169 = scmp.eq.s32.totalorder %s26, 1
      %p170 = por %p168, %p169
      %p171 = scmp.ne.s32.totalorder %s162, %s163
      %p172 = scmp.eq.s32.totalorder %s26, 0
      %p173 = por %p171, %p172
      %p174 = scmp.ne.s32.totalorder %s162, %s163
      %p175 = scmp.eq.s32.totalorder %s27, 1
      %p176 = por %p174, %p175
      %p178 = scmp.ne.s32.totalorder %s163, %s177
      %p179 = scmp.eq.s32.totalorder %s27, 0
      %p180 = por %p178, %p179
      %s182 = sadd.s32 %s181, 1
      %p185 = scmp.eq.s32.totalorder %s21, 1
      %p186 = scmp.ne.s32.totalorder %s181, %s183
      %p187 = scmp.eq.s32.totalorder %s21, 0
      %p188 = por %p186, %p187
      %p189 = scmp.ne.s32.totalorder %s181, %s183
      %p190 = scmp.eq.s32.totalorder %s26, 1
      %p191 = por %p189, %p190
      %p192 = scmp.ne.s32.totalorder %s183, %s184
      %p193 = scmp.eq.s32.totalorder %s26, 0
      %p194 = por %p192, %p193
      %p195 = scmp.ne.s32.totalorder %s183, %s184
      %p196 = scmp.eq.s32.totalorder %s27, 1
      %p197 = por %p195, %p196
      %p199 = scmp.ne.s32.totalorder %s184, %s198
      %p200 = scmp.eq.s32.totalorder %s27, 0
      %p201 = por %p199, %p200
      %s203 = sadd.s32 %s202, 1
      %p206 = scmp.eq.s32.totalorder %s21, 1
      %p207 = scmp.ne.s32.totalorder %s202, %s204
      %p208 = scmp.eq.s32.totalorder %s21, 0
      %p209 = por %p207, %p208
      %p210 = scmp.ne.s32.totalorder %s202, %s204
      %p211 = scmp.eq.s32.totalorder %s26, 1
      %p212 = por %p210, %p211
      %p213 = scmp.ne.s32.totalorder %s204, %s205
      %p214 = scmp.eq.s32.totalorder %s26, 0
      %p215 = por %p213, %p214
      %p216 = scmp.ne.s32.totalorder %s204, %s205
      %p217 = scmp.eq.s32.totalorder %s27, 1
      %p218 = por %p216, %p217
      %p220 = scmp.ne.s32.totalorder %s205, %s219
      %p221 = scmp.eq.s32.totalorder %s27, 0
      %p222 = por %p220, %p221
      %s224 = sadd.s32 %s223, 1
      %p227 = scmp.eq.s32.totalorder %s21, 1
      %p228 = scmp.ne.s32.totalorder %s223, %s225
      %p229 = scmp.eq.s32.totalorder %s21, 0
      %p230 = por %p228, %p229
      %p231 = scmp.ne.s32.totalorder %s223, %s225
      %p232 = scmp.eq.s32.totalorder %s26, 1
      %p233 = por %p231, %p232
      %p234 = scmp.ne.s32.totalorder %s225, %s226
      %p235 = scmp.eq.s32.totalorder %s26, 0
      %p236 = por %p234, %p235
      %p237 = scmp.ne.s32.totalorder %s225, %s226
      %p238 = scmp.eq.s32.totalorder %s27, 1
      %p239 = por %p237, %p238
      %p241 = scmp.ne.s32.totalorder %s226, %s240
      %p242 = scmp.eq.s32.totalorder %s27, 0
      %p243 = por %p241, %p242
      %s245 = sadd.s32 %s244, 1
      %p248 = scmp.eq.s32.totalorder %s21, 1
      %p249 = scmp.ne.s32.totalorder %s244, %s246
      %p250 = scmp.eq.s32.totalorder %s21, 0
      %p251 = por %p249, %p250
      %p252 = scmp.ne.s32.totalorder %s244, %s246
      %p253 = scmp.eq.s32.totalorder %s26, 1
      %p254 = por %p252, %p253
      %p255 = scmp.ne.s32.totalorder %s246, %s247
      %p256 = scmp.eq.s32.totalorder %s26, 0
      %p257 = por %p255, %p256
      %p258 = scmp.ne.s32.totalorder %s246, %s247
      %p259 = scmp.eq.s32.totalorder %s27, 1
      %p260 = por %p258, %p259
      %p262 = scmp.ne.s32.totalorder %s247, %s261
      %p263 = scmp.eq.s32.totalorder %s27, 0
      %p264 = por %p262, %p263
      %s266 = sadd.s32 %s265, 1
      %p269 = scmp.eq.s32.totalorder %s21, 1
      %p270 = scmp.ne.s32.totalorder %s265, %s267
      %p271 = scmp.eq.s32.totalorder %s21, 0
      %p272 = por %p270, %p271
      %p273 = scmp.ne.s32.totalorder %s265, %s267
      %p274 = scmp.eq.s32.totalorder %s26, 1
      %p275 = por %p273, %p274
      %p276 = scmp.ne.s32.totalorder %s267, %s268
      %p277 = scmp.eq.s32.totalorder %s26, 0
      %p278 = por %p276, %p277
      %p279 = scmp.ne.s32.totalorder %s267, %s268
      %p280 = scmp.eq.s32.totalorder %s27, 1
      %p281 = por %p279, %p280
      %p283 = scmp.ne.s32.totalorder %s268, %s282
      %p284 = scmp.eq.s32.totalorder %s27, 0
      %p285 = por %p283, %p284
      %s286 = ssub.s32 %s21, %s28
      %p287 = scmp.eq.s32.totalorder %s286, 0
      %s289 = sadd.s32 %s288, 1
      %s290 = scalar_select %p287, %s288, %s289
      %p293 = pneg %p287
      %p294 = scmp.eq.s32.totalorder %s21, 1
      %p295 = por %p293, %p294
      %p296 = scmp.ne.s32.totalorder %s288, %s291
      %p297 = scmp.eq.s32.totalorder %s21, 0
      %p298 = por %p296, %p297
      %p299 = scmp.ne.s32.totalorder %s288, %s291
      %p300 = scmp.eq.s32.totalorder %s26, 1
      %p301 = por %p299, %p300
      %p302 = scmp.ne.s32.totalorder %s291, %s292
      %p303 = scmp.eq.s32.totalorder %s26, 0
      %p304 = por %p302, %p303
      %p305 = scmp.ne.s32.totalorder %s291, %s292
      %p306 = scmp.eq.s32.totalorder %s27, 1
      %p307 = por %p305, %p306
      %p309 = scmp.ne.s32.totalorder %s292, %s308
      %p310 = scmp.eq.s32.totalorder %s27, 0
      %p311 = por %p309, %p310
      %p312 = scmp.le.s32.totalorder 1, %s21
      %p313 = scmp.lt.s32.totalorder %s21, 3
      %p314 = pnand %p312, %p313
      %p315 = pneg %p314
      // Predicated region
      $region9: #{tpu_custom_call.1} parent=5 // pred_check
        _
      $region10: #{tpu_custom_call.1} parent=5 // pred_check_branch
        %317 = sbr.rel (%p314) target = $region12
      $region11: #{tpu_custom_call.1} parent=5 // pred_region
        %s318 = ssub.s32 %s21, 1
        // Predicated region
        $region13: #{tpu_custom_call.1} parent=11 // pred_check
          %p319 = pneg %p68
        $region14: #{tpu_custom_call.1} parent=11 // pred_check_branch
          %321 = sbr.rel (%p319) target = $region16
        $region15: #{tpu_custom_call.1} parent=11 // pred_region
          _
        $region16: #{tpu_custom_call.1} parent=11 // pred_fallthru
          _
        // Predicated region
        $region17: #{tpu_custom_call.1} parent=11 // pred_check
          %p322 = pneg %p89
        $region18: #{tpu_custom_call.1} parent=11 // pred_check_branch
          %324 = sbr.rel (%p322) target = $region20
        $region19: #{tpu_custom_call.1} parent=11 // pred_region
          _
        $region20: #{tpu_custom_call.1} parent=11 // pred_fallthru
          _
        // Predicated region
        $region21: #{tpu_custom_call.1} parent=11 // pred_check
          %p325 = pneg %p110
        $region22: #{tpu_custom_call.1} parent=11 // pred_check_branch
          %327 = sbr.rel (%p325) target = $region24
        $region23: #{tpu_custom_call.1} parent=11 // pred_region
          _
        $region24: #{tpu_custom_call.1} parent=11 // pred_fallthru
          _
        // Predicated region
        $region25: #{tpu_custom_call.1} parent=11 // pred_check
          %p328 = pneg %p131
        $region26: #{tpu_custom_call.1} parent=11 // pred_check_branch
          %330 = sbr.rel (%p328) target = $region28
        $region27: #{tpu_custom_call.1} parent=11 // pred_region
          _
        $region28: #{tpu_custom_call.1} parent=11 // pred_fallthru
          _
        // Predicated region
        $region29: #{tpu_custom_call.1} parent=11 // pred_check
          %p331 = pneg %p152
        $region30: #{tpu_custom_call.1} parent=11 // pred_check_branch
          %333 = sbr.rel (%p331) target = $region32
        $region31: #{tpu_custom_call.1} parent=11 // pred_region
          _
        $region32: #{tpu_custom_call.1} parent=11 // pred_fallthru
          _
        // Predicated region
        $region33: #{tpu_custom_call.1} parent=11 // pred_check
          %p334 = pneg %p173
        $region34: #{tpu_custom_call.1} parent=11 // pred_check_branch
          %336 = sbr.rel (%p334) target = $region36
        $region35: #{tpu_custom_call.1} parent=11 // pred_region
          _
        $region36: #{tpu_custom_call.1} parent=11 // pred_fallthru
          _
        // Predicated region
        $region37: #{tpu_custom_call.1} parent=11 // pred_check
          %p337 = pneg %p194
        $region38: #{tpu_custom_call.1} parent=11 // pred_check_branch
          %339 = sbr.rel (%p337) target = $region40
        $region39: #{tpu_custom_call.1} parent=11 // pred_region
          _
        $region40: #{tpu_custom_call.1} parent=11 // pred_fallthru
          _
        // Predicated region
        $region41: #{tpu_custom_call.1} parent=11 // pred_check
          %p340 = pneg %p215
        $region42: #{tpu_custom_call.1} parent=11 // pred_check_branch
          %342 = sbr.rel (%p340) target = $region44
        $region43: #{tpu_custom_call.1} parent=11 // pred_region
          _
        $region44: #{tpu_custom_call.1} parent=11 // pred_fallthru
          _
        // Predicated region
        $region45: #{tpu_custom_call.1} parent=11 // pred_check
          %p343 = pneg %p236
        $region46: #{tpu_custom_call.1} parent=11 // pred_check_branch
          %345 = sbr.rel (%p343) target = $region48
        $region47: #{tpu_custom_call.1} parent=11 // pred_region
          _
        $region48: #{tpu_custom_call.1} parent=11 // pred_fallthru
          _
        // Predicated region
        $region49: #{tpu_custom_call.1} parent=11 // pred_check
          %p346 = pneg %p257
        $region50: #{tpu_custom_call.1} parent=11 // pred_check_branch
          %348 = sbr.rel (%p346) target = $region52
        $region51: #{tpu_custom_call.1} parent=11 // pred_region
          _
        $region52: #{tpu_custom_call.1} parent=11 // pred_fallthru
          _
        // Predicated region
        $region53: #{tpu_custom_call.1} parent=11 // pred_check
          %p349 = pneg %p278
        $region54: #{tpu_custom_call.1} parent=11 // pred_check_branch
          %351 = sbr.rel (%p349) target = $region56
        $region55: #{tpu_custom_call.1} parent=11 // pred_region
          _
        $region56: #{tpu_custom_call.1} parent=11 // pred_fallthru
          _
      $region12: #{tpu_custom_call.1} parent=5 // pred_fallthru
        _
      %p352 = scmp.lt.s32.totalorder %s21, 2
      // Predicated region
      $region57: #{tpu_custom_call.1} parent=5 // pred_check
        %p353 = pneg %p352
      $region58: #{tpu_custom_call.1} parent=5 // pred_check_branch
        %355 = sbr.rel (%p353) target = $region60
      $region59: #{tpu_custom_call.1} parent=5 // pred_region
        // Predicated region
        $region61: #{tpu_custom_call.1} parent=59 // pred_check
          %p356 = pneg %p41
        $region62: #{tpu_custom_call.1} parent=59 // pred_check_branch
          %358 = sbr.rel (%p356) target = $region64
        $region63: #{tpu_custom_call.1} parent=59 // pred_region
          %p359 = scmp.lt.s32.totalorder %s21, 1
          %s360 = scalar_select %p359, %s21, 1
          %s361 = smul.addr %s360, 8
          %s362 = scalar_lea.vmem %s0, %s361
        $region64: #{tpu_custom_call.1} parent=59 // pred_fallthru
          _
      $region60: #{tpu_custom_call.1} parent=5 // pred_fallthru
        _
      %p363 = scmp.le.s32.totalorder 1, %s21
      %p364 = scmp.lt.s32.totalorder %s21, 3
      %p365 = pnand %p363, %p364
      %p366 = pneg %p365
      // Predicated region
      $region65: #{tpu_custom_call.1} parent=5 // pred_check
        _
      $region66: #{tpu_custom_call.1} parent=5 // pred_check_branch
        %368 = sbr.rel (%p365) target = $region68
      $region67: #{tpu_custom_call.1} parent=5 // pred_region
        %s369 = ssub.s32 %s21, 1
        %p370 = scmp.lt.s32.totalorder %s26, 1
        %s371 = scalar_select %p370, %s26, 1
        %s372 = smul.addr %s371, 8
        %s373 = scalar_lea.vmem %s0, %s372
        %p374 = pneg %p47
        %p375 = pneg %p44
        %p376 = pneg %p68
        %p377 = pneg %p65
        %p378 = pneg %p89
        %p379 = pneg %p86
        %p380 = pneg %p110
        %p381 = pneg %p107
        %p382 = pneg %p131
        %p383 = pneg %p128
        %p384 = pneg %p152
        %p385 = pneg %p149
        %p386 = pneg %p173
        %p387 = pneg %p170
        %p388 = pneg %p194
        %p389 = pneg %p191
        %p390 = pneg %p215
        %p391 = pneg %p212
        %p392 = pneg %p236
        %p393 = pneg %p233
        %p394 = pneg %p257
        %p395 = pneg %p254
        %p396 = pneg %p278
        %p397 = pneg %p275
        %p398 = pneg %p304
        %p399 = pneg %p301
        %s400 = sand.u32 %s291, 1
        %s401 = scalar_lea.sflag [#allocation3], %s400
        %s402 = sand.u32 %s291, 1
        %s403 = smul.addr %s402, 8
        %s404 = scalar_lea.vmem [#allocation2], %s403
        %p405 = scmp.lt.s32.totalorder %s26, 1
        %s406 = scalar_select %p405, %s26, 1
        %s407 = smul.addr %s406, 8
        %s408 = scalar_lea.vmem %s0, %s407
        %v410 = vld [vmem:[%s408] sm:$0xff]
        %v411 = vld [vmem:[%s1] sm:$0x1]
        %v412 = vld [vmem:[%s2] sm:$0x1]
        %vm413 = vcmask 261120
        %v414 = vsel %vm413, %v410, 0.0
        %415 = vadd.xlane.f32.xlu0 %v414
        %v416 = vpop.xlane.xlu0 %415
        %v417 = vrcp.pop 32.0
        %v418 = vmul.f32 %v416, %v417
        %v419 = vsub.f32 %v410, %v418
        %v420 = vmul.f32 %v419, %v419
        %v421 = vsel %vm413, %v420, 0.0
        %422 = vadd.xlane.f32.xlu0 %v421
        %v423 = vpop.xlane.xlu0 %422
        %v424 = vmul.f32 %v423, %v417
        %v425 = vadd.f32 %v424, 1e-05
        %v426 = vrsqrt.pop %v425
        %v427 = vmul.f32 %v419, %v426
        %v429 = vlaneseq
        %v430 = vshrl.u32 %v429, 7
        %v431 = vsub.s32 0, %v430
        %v432 = vrot.slane %v411, %v431
        %v434 = vmul.f32 %v427, %v432
        %v436 = vlaneseq
        %v437 = vshrl.u32 %v436, 7
        %v438 = vsub.s32 0, %v437
        %v439 = vrot.slane %v412, %v438
        %v441 = vadd.f32 %v434, %v439
        %v442 = vpack.c.bf16 %v441, %v441
        %v443 = vld [vmem:[%s3] sm:$0xf]
        %v444 = vld [vmem:[%s3 + $0x4] sm:$0xf]
        %v445 = vld [vmem:[%s3 + $0x8] sm:$0xf]
        %v446 = vld [vmem:[%s3 + $0xc] sm:$0xf]
        %v451 = vunpack.c.l.b16 %v443
        %v452 = vunpack.c.l.b16 %v444
        %v453 = vunpack.c.l.b16 %v445
        %v454 = vunpack.c.l.b16 %v446
        %v455 = vpack.c.b16 %v452, %v451
        %v456 = vpack.c.b16 %v454, %v453
        %v460 = vsel %vm413, %v442, 0
        %462 = vmatprep.subr.bf16.mxu0 0
        %463 = vmatpush1.bf16.msra.mxu0 %v455
        %464 = vmatprep.subr.bf16.mxu0 0
        %465 = vmatpush1.bf16.msra.mxu0 %v456
        %466 = vmatprep.subr.bf16.mxu0 0
        %467 = vmatpush1.bf16.msra.mxu0 0
        %468 = vmatprep.subr.bf16.mxu0 0
        %469 = vmatpush1.bf16.msra.mxu0 0
        %470 = vmatprep.subr.bf16.mxu0 0
        %471 = vmatpush1.bf16.msra.mxu0 0
        %472 = vmatprep.subr.bf16.mxu0 0
        %473 = vmatpush1.bf16.msra.mxu0 0
        %474 = vmatprep.subr.bf16.mxu0 0
        %475 = vmatpush1.bf16.msra.mxu0 0
        %476 = vmatprep.subr.bf16.mxu0 0
        %477 = vmatpush1.bf16.msra.mxu0 0
        %478 = vmatprep.subr.bf16.mxu0 0
        %479 = vmatpush1.bf16.msra.mxu0 0
        %480 = vmatprep.subr.bf16.mxu0 0
        %481 = vmatpush1.bf16.msra.mxu0 0
        %482 = vmatprep.subr.bf16.mxu0 0
        %483 = vmatpush1.bf16.msra.mxu0 0
        %484 = vmatprep.subr.bf16.mxu0 0
        %485 = vmatpush1.bf16.msra.mxu0 0
        %486 = vmatprep.subr.bf16.mxu0 0
        %487 = vmatpush1.bf16.msra.mxu0 0
        %488 = vmatprep.subr.bf16.mxu0 0
        %489 = vmatpush1.bf16.msra.mxu0 0
        %490 = vmatprep.subr.bf16.mxu0 0
        %491 = vmatpush1.bf16.msra.mxu0 0
        %492 = vmatprep.subr.bf16.mxu0 0
        %493 = vmatpush1.bf16.msra.mxu0 0
        %494 = vmatprep.mubr.bf16.mxu0 0
        %495 = vmatmul.mubr.bf16.gmra.mrb[0].mxu0 %v460
        %v496 = vpop.f32.mrb[0].mxu0
        %v497 = vadd.f32 0.0, %v496
        %v498 = vpop.f32.mrb[0].mxu0
        %v499 = vpop.f32.mrb[0].mxu0
        %v500 = vpop.f32.mrb[0].mxu0
        %501 = vdwg.mxu0
        %v502 = vpack.c.bf16 %v497, %v497
        %504 = vrot.lane.b32.xlu0 %v502, 120
        %v505 = vpop.permute.xlu0 %504
        %506 = vrot.lane.b32.xlu0 %v502, 112
        %v507 = vpop.permute.xlu0 %506
        %508 = vrot.lane.b32.xlu0 %v502, 104
        %v509 = vpop.permute.xlu0 %508
        %510 = vrot.lane.b32.xlu0 %v502, 96
        %v511 = vpop.permute.xlu0 %510
        %vm512 = vcmask 64512
        %v514 = vsel %vm512, %v502, 0
        %v517 = vsel %vm512, %v511, 0
        %519 = vmatprep.subr.bf16.mxu0 0
        %520 = vmatpush1.bf16.xpose.msra.mxu0 %v517
        %521 = vmatprep.subr.bf16.mxu0 0
        %522 = vmatpush1.bf16.xpose.msra.mxu0 0
        %523 = vmatprep.subr.bf16.mxu0 0
        %524 = vmatpush1.bf16.xpose.msra.mxu0 0
        %525 = vmatprep.subr.bf16.mxu0 0
        %526 = vmatpush1.bf16.xpose.msra.mxu0 0
        %527 = vmatprep.subr.bf16.mxu0 0
        %528 = vmatpush1.bf16.xpose.msra.mxu0 0
        %529 = vmatprep.subr.bf16.mxu0 0
        %530 = vmatpush1.bf16.xpose.msra.mxu0 0
        %531 = vmatprep.subr.bf16.mxu0 0
        %532 = vmatpush1.bf16.xpose.msra.mxu0 0
        %533 = vmatprep.subr.bf16.mxu0 0
        %534 = vmatpush1.bf16.xpose.msra.mxu0 0
        %535 = vmatprep.subr.bf16.mxu0 0
        %536 = vmatpush1.bf16.xpose.msra.mxu0 0
        %537 = vmatprep.subr.bf16.mxu0 0
        %538 = vmatpush1.bf16.xpose.msra.mxu0 0
        %539 = vmatprep.subr.bf16.mxu0 0
        %540 = vmatpush1.bf16.xpose.msra.mxu0 0
        %541 = vmatprep.subr.bf16.mxu0 0
        %542 = vmatpush1.bf16.xpose.msra.mxu0 0
        %543 = vmatprep.subr.bf16.mxu0 0
        %544 = vmatpush1.bf16.xpose.msra.mxu0 0
        %545 = vmatprep.subr.bf16.mxu0 0
        %546 = vmatpush1.bf16.xpose.msra.mxu0 0
        %547 = vmatprep.subr.bf16.mxu0 0
        %548 = vmatpush1.bf16.xpose.msra.mxu0 0
        %549 = vmatprep.subr.bf16.mxu0 0
        %550 = vmatpush1.bf16.xpose.msra.mxu0 0
        %551 = vmatprep.mubr.bf16.mxu0 0
        %552 = vmatmul.mubr.bf16.gmra.mrb[0].mxu0 %v514
        %v553 = vpop.f32.mrb[0].mxu0
        %v554 = vadd.f32 0.0, %v553
        %v555 = vpop.f32.mrb[0].mxu0
        %v556 = vpop.f32.mrb[0].mxu0
        %v557 = vpop.f32.mrb[0].mxu0
        %558 = vdwg.mxu0
        %559 = vrot.lane.b32.xlu0 %v505, 96
        %v560 = vpop.permute.xlu0 %559
        %v562 = vsel %vm512, %v505, 0
        %v565 = vsel %vm512, %v560, 0
        %567 = vmatprep.subr.bf16.mxu0 0
        %568 = vmatpush1.bf16.xpose.msra.mxu0 %v565
        %569 = vmatprep.subr.bf16.mxu0 0
        %570 = vmatpush1.bf16.xpose.msra.mxu0 0
        %571 = vmatprep.subr.bf16.mxu0 0
        %572 = vmatpush1.bf16.xpose.msra.mxu0 0
        %573 = vmatprep.subr.bf16.mxu0 0
        %574 = vmatpush1.bf16.xpose.msra.mxu0 0
        %575 = vmatprep.subr.bf16.mxu0 0
        %576 = vmatpush1.bf16.xpose.msra.mxu0 0
        %577 = vmatprep.subr.bf16.mxu0 0
        %578 = vmatpush1.bf16.xpose.msra.mxu0 0
        %579 = vmatprep.subr.bf16.mxu0 0
        %580 = vmatpush1.bf16.xpose.msra.mxu0 0
        %581 = vmatprep.subr.bf16.mxu0 0
        %582 = vmatpush1.bf16.xpose.msra.mxu0 0
        %583 = vmatprep.subr.bf16.mxu0 0
        %584 = vmatpush1.bf16.xpose.msra.mxu0 0
        %585 = vmatprep.subr.bf16.mxu0 0
        %586 = vmatpush1.bf16.xpose.msra.mxu0 0
        %587 = vmatprep.subr.bf16.mxu0 0
        %588 = vmatpush1.bf16.xpose.msra.mxu0 0
        %589 = vmatprep.subr.bf16.mxu0 0
        %590 = vmatpush1.bf16.xpose.msra.mxu0 0
        %591 = vmatprep.subr.bf16.mxu0 0
        %592 = vmatpush1.bf16.xpose.msra.mxu0 0
        %593 = vmatprep.subr.bf16.mxu0 0
        %594 = vmatpush1.bf16.xpose.msra.mxu0 0
        %595 = vmatprep.subr.bf16.mxu0 0
        %596 = vmatpush1.bf16.xpose.msra.mxu0 0
        %597 = vmatprep.subr.bf16.mxu0 0
        %598 = vmatpush1.bf16.xpose.msra.mxu0 0
        %599 = vmatprep.mubr.bf16.mxu0 0
        %600 = vmatmul.mubr.bf16.gmra.mrb[0].mxu0 %v562
        %v601 = vpop.f32.mrb[0].mxu0
        %v602 = vadd.f32 0.0, %v601
        %v603 = vpop.f32.mrb[0].mxu0
        %v604 = vpop.f32.mrb[0].mxu0
        %v605 = vpop.f32.mrb[0].mxu0
        %606 = vdwg.mxu0
        %607 = vrot.lane.b32.xlu0 %v507, 96
        %v608 = vpop.permute.xlu0 %607
        %v610 = vsel %vm512, %v507, 0
        %v613 = vsel %vm512, %v608, 0
        %615 = vmatprep.subr.bf16.mxu0 0
        %616 = vmatpush1.bf16.xpose.msra.mxu0 %v613
        %617 = vmatprep.subr.bf16.mxu0 0
        %618 = vmatpush1.bf16.xpose.msra.mxu0 0
        %619 = vmatprep.subr.bf16.mxu0 0
        %620 = vmatpush1.bf16.xpose.msra.mxu0 0
        %621 = vmatprep.subr.bf16.mxu0 0
        %622 = vmatpush1.bf16.xpose.msra.mxu0 0
        %623 = vmatprep.subr.bf16.mxu0 0
        %624 = vmatpush1.bf16.xpose.msra.mxu0 0
        %625 = vmatprep.subr.bf16.mxu0 0
        %626 = vmatpush1.bf16.xpose.msra.mxu0 0
        %627 = vmatprep.subr.bf16.mxu0 0
        %628 = vmatpush1.bf16.xpose.msra.mxu0 0
        %629 = vmatprep.subr.bf16.mxu0 0
        %630 = vmatpush1.bf16.xpose.msra.mxu0 0
        %631 = vmatprep.subr.bf16.mxu0 0
        %632 = vmatpush1.bf16.xpose.msra.mxu0 0
        %633 = vmatprep.subr.bf16.mxu0 0
        %634 = vmatpush1.bf16.xpose.msra.mxu0 0
        %635 = vmatprep.subr.bf16.mxu0 0
        %636 = vmatpush1.bf16.xpose.msra.mxu0 0
        %637 = vmatprep.subr.bf16.mxu0 0
        %638 = vmatpush1.bf16.xpose.msra.mxu0 0
        %639 = vmatprep.subr.bf16.mxu0 0
        %640 = vmatpush1.bf16.xpose.msra.mxu0 0
        %641 = vmatprep.subr.bf16.mxu0 0
        %642 = vmatpush1.bf16.xpose.msra.mxu0 0
        %643 = vmatprep.subr.bf16.mxu0 0
        %644 = vmatpush1.bf16.xpose.msra.mxu0 0
        %645 = vmatprep.subr.bf16.mxu0 0
        %646 = vmatpush1.bf16.xpose.msra.mxu0 0
        %647 = vmatprep.mubr.bf16.mxu0 0
        %648 = vmatmul.mubr.bf16.gmra.mrb[0].mxu0 %v610
        %v649 = vpop.f32.mrb[0].mxu0
        %v650 = vadd.f32 0.0, %v649
        %v651 = vpop.f32.mrb[0].mxu0
        %v652 = vpop.f32.mrb[0].mxu0
        %v653 = vpop.f32.mrb[0].mxu0
        %654 = vdwg.mxu0
        %655 = vrot.lane.b32.xlu0 %v509, 96
        %v656 = vpop.permute.xlu0 %655
        %v658 = vsel %vm512, %v509, 0
        %v661 = vsel %vm512, %v656, 0
        %663 = vmatprep.subr.bf16.mxu0 0
        %664 = vmatpush1.bf16.xpose.msra.mxu0 %v661
        %665 = vmatprep.subr.bf16.mxu0 0
        %666 = vmatpush1.bf16.xpose.msra.mxu0 0
        %667 = vmatprep.subr.bf16.mxu0 0
        %668 = vmatpush1.bf16.xpose.msra.mxu0 0
        %669 = vmatprep.subr.bf16.mxu0 0
        %670 = vmatpush1.bf16.xpose.msra.mxu0 0
        %671 = vmatprep.subr.bf16.mxu0 0
        %672 = vmatpush1.bf16.xpose.msra.mxu0 0
        %673 = vmatprep.subr.bf16.mxu0 0
        %674 = vmatpush1.bf16.xpose.msra.mxu0 0
        %675 = vmatprep.subr.bf16.mxu0 0
        %676 = vmatpush1.bf16.xpose.msra.mxu0 0
        %677 = vmatprep.subr.bf16.mxu0 0
        %678 = vmatpush1.bf16.xpose.msra.mxu0 0
        %679 = vmatprep.subr.bf16.mxu0 0
        %680 = vmatpush1.bf16.xpose.msra.mxu0 0
        %681 = vmatprep.subr.bf16.mxu0 0
        %682 = vmatpush1.bf16.xpose.msra.mxu0 0
        %683 = vmatprep.subr.bf16.mxu0 0
        %684 = vmatpush1.bf16.xpose.msra.mxu0 0
        %685 = vmatprep.subr.bf16.mxu0 0
        %686 = vmatpush1.bf16.xpose.msra.mxu0 0
        %687 = vmatprep.subr.bf16.mxu0 0
        %688 = vmatpush1.bf16.xpose.msra.mxu0 0
        %689 = vmatprep.subr.bf16.mxu0 0
        %690 = vmatpush1.bf16.xpose.msra.mxu0 0
        %691 = vmatprep.subr.bf16.mxu0 0
        %692 = vmatpush1.bf16.xpose.msra.mxu0 0
        %693 = vmatprep.subr.bf16.mxu0 0
        %694 = vmatpush1.bf16.xpose.msra.mxu0 0
        %695 = vmatprep.mubr.bf16.mxu0 0
        %696 = vmatmul.mubr.bf16.gmra.mrb[0].mxu0 %v658
        %v697 = vpop.f32.mrb[0].mxu0
        %v698 = vadd.f32 0.0, %v697
        %v699 = vpop.f32.mrb[0].mxu0
        %v700 = vpop.f32.mrb[0].mxu0
        %v701 = vpop.f32.mrb[0].mxu0
        %702 = vdwg.mxu0
        %v703 = vsel %vm512, %v554, -inf
        %704 = vmax.xlane.f32.xlu0 %v703
        %v705 = vpop.xlane.xlu0 %704
        %v706 = vsel %vm512, %v602, -inf
        %707 = vmax.xlane.f32.xlu0 %v706
        %v708 = vpop.xlane.xlu0 %707
        %v709 = vsel %vm512, %v650, -inf
        %710 = vmax.xlane.f32.xlu0 %v709
        %v711 = vpop.xlane.xlu0 %710
        %v712 = vsel %vm512, %v698, -inf
        %713 = vmax.xlane.f32.xlu0 %v712
        %v714 = vpop.xlane.xlu0 %713
        %v715 = vsub.f32 %v554, %v705
        %v716 = vsub.f32 %v602, %v708
        %v717 = vsub.f32 %v650, %v711
        %v718 = vsub.f32 %v698, %v714
        %v719 = vmul.f32 %v715, 1.442695
        %v720 = vpow.pop %v719
        %v721 = vmul.f32 %v716, 1.442695
        %v722 = vpow.pop %v721
        %v723 = vmul.f32 %v717, 1.442695
        %v724 = vpow.pop %v723
        %v725 = vmul.f32 %v718, 1.442695
        %v726 = vpow.pop %v725
        %v727 = vsel %vm512, %v720, 0.0
        %728 = vadd.xlane.f32.xlu0 %v727
        %v729 = vpop.xlane.xlu0 %728
        %v730 = vsel %vm512, %v722, 0.0
        %731 = vadd.xlane.f32.xlu0 %v730
        %v732 = vpop.xlane.xlu0 %731
        %v733 = vsel %vm512, %v724, 0.0
        %734 = vadd.xlane.f32.xlu0 %v733
        %v735 = vpop.xlane.xlu0 %734
        %v736 = vsel %vm512, %v726, 0.0
        %737 = vadd.xlane.f32.xlu0 %v736
        %v738 = vpop.xlane.xlu0 %737
        %v739 = vrcp.pop %v729
        %v740 = vrcp.pop %v732
        %v741 = vrcp.pop %v735
        %v742 = vrcp.pop %v738
        %v743 = vmul.f32 %v720, %v739
        %v744 = vmul.f32 %v722, %v740
        %v745 = vmul.f32 %v724, %v741
        %v746 = vmul.f32 %v726, %v742
        %v747 = vpack.c.bf16 %v743, %v743
        %v748 = vpack.c.bf16 %v744, %v744
        %v749 = vpack.c.bf16 %v745, %v745
        %v750 = vpack.c.bf16 %v746, %v746
        %751 = vrot.lane.b32.xlu0 %v502, 64
        %v752 = vpop.permute.xlu0 %751
        %v754 = vsel %vm512, %v747, 0
        %vm756 = vcmask 1043456
        %v758 = vsel %vm756, %v752, 0
        %760 = vmatprep.subr.bf16.mxu0 0
        %761 = vmatpush1.bf16.msra.mxu0 %v758
        %762 = vmatprep.subr.bf16.mxu0 0
        %763 = vmatpush1.bf16.msra.mxu0 0
        %764 = vmatprep.subr.bf16.mxu0 0
        %765 = vmatpush1.bf16.msra.mxu0 0
        %766 = vmatprep.subr.bf16.mxu0 0
        %767 = vmatpush1.bf16.msra.mxu0 0
        %768 = vmatprep.subr.bf16.mxu0 0
        %769 = vmatpush1.bf16.msra.mxu0 0
        %770 = vmatprep.subr.bf16.mxu0 0
        %771 = vmatpush1.bf16.msra.mxu0 0
        %772 = vmatprep.subr.bf16.mxu0 0
        %773 = vmatpush1.bf16.msra.mxu0 0
        %774 = vmatprep.subr.bf16.mxu0 0
        %775 = vmatpush1.bf16.msra.mxu0 0
        %776 = vmatprep.subr.bf16.mxu0 0
        %777 = vmatpush1.bf16.msra.mxu0 0
        %778 = vmatprep.subr.bf16.mxu0 0
        %779 = vmatpush1.bf16.msra.mxu0 0
        %780 = vmatprep.subr.bf16.mxu0 0
        %781 = vmatpush1.bf16.msra.mxu0 0
        %782 = vmatprep.subr.bf16.mxu0 0
        %783 = vmatpush1.bf16.msra.mxu0 0
        %784 = vmatprep.subr.bf16.mxu0 0
        %785 = vmatpush1.bf16.msra.mxu0 0
        %786 = vmatprep.subr.bf16.mxu0 0
        %787 = vmatpush1.bf16.msra.mxu0 0
        %788 = vmatprep.subr.bf16.mxu0 0
        %789 = vmatpush1.bf16.msra.mxu0 0
        %790 = vmatprep.subr.bf16.mxu0 0
        %791 = vmatpush1.bf16.msra.mxu0 0
        %792 = vmatprep.mubr.bf16.mxu0 0
        %793 = vmatmul.mubr.bf16.gmra.mrb[0].mxu0 %v754
        %v794 = vpop.f32.mrb[0].mxu0
        %v795 = vadd.f32 0.0, %v794
        %v796 = vpop.f32.mrb[0].mxu0
        %v797 = vpop.f32.mrb[0].mxu0
        %v798 = vpop.f32.mrb[0].mxu0
        %799 = vdwg.mxu0
        %800 = vrot.lane.b32.xlu0 %v505, 64
        %v801 = vpop.permute.xlu0 %800
        %v803 = vsel %vm512, %v748, 0
        %v806 = vsel %vm756, %v801, 0
        %808 = vmatprep.subr.bf16.mxu0 0
        %809 = vmatpush1.bf16.msra.mxu0 %v806
        %810 = vmatprep.subr.bf16.mxu0 0
        %811 = vmatpush1.bf16.msra.mxu0 0
        %812 = vmatprep.subr.bf16.mxu0 0
        %813 = vmatpush1.bf16.msra.mxu0 0
        %814 = vmatprep.subr.bf16.mxu0 0
        %815 = vmatpush1.bf16.msra.mxu0 0
        %816 = vmatprep.subr.bf16.mxu0 0
        %817 = vmatpush1.bf16.msra.mxu0 0
        %818 = vmatprep.subr.bf16.mxu0 0
        %819 = vmatpush1.bf16.msra.mxu0 0
        %820 = vmatprep.subr.bf16.mxu0 0
        %821 = vmatpush1.bf16.msra.mxu0 0
        %822 = vmatprep.subr.bf16.mxu0 0
        %823 = vmatpush1.bf16.msra.mxu0 0
        %824 = vmatprep.subr.bf16.mxu0 0
        %825 = vmatpush1.bf16.msra.mxu0 0
        %826 = vmatprep.subr.bf16.mxu0 0
        %827 = vmatpush1.bf16.msra.mxu0 0
        %828 = vmatprep.subr.bf16.mxu0 0
        %829 = vmatpush1.bf16.msra.mxu0 0
        %830 = vmatprep.subr.bf16.mxu0 0
        %831 = vmatpush1.bf16.msra.mxu0 0
        %832 = vmatprep.subr.bf16.mxu0 0
        %833 = vmatpush1.bf16.msra.mxu0 0
        %834 = vmatprep.subr.bf16.mxu0 0
        %835 = vmatpush1.bf16.msra.mxu0 0
        %836 = vmatprep.subr.bf16.mxu0 0
        %837 = vmatpush1.bf16.msra.mxu0 0
        %838 = vmatprep.subr.bf16.mxu0 0
        %839 = vmatpush1.bf16.msra.mxu0 0
        %840 = vmatprep.mubr.bf16.mxu0 0
        %841 = vmatmul.mubr.bf16.gmra.mrb[0].mxu0 %v803
        %v842 = vpop.f32.mrb[0].mxu0
        %v843 = vadd.f32 0.0, %v842
        %v844 = vpop.f32.mrb[0].mxu0
        %v845 = vpop.f32.mrb[0].mxu0
        %v846 = vpop.f32.mrb[0].mxu0
        %847 = vdwg.mxu0
        %848 = vrot.lane.b32.xlu0 %v507, 64
        %v849 = vpop.permute.xlu0 %848
        %v851 = vsel %vm512, %v749, 0
        %v854 = vsel %vm756, %v849, 0
        %856 = vmatprep.subr.bf16.mxu0 0
        %857 = vmatpush1.bf16.msra.mxu0 %v854
        %858 = vmatprep.subr.bf16.mxu0 0
        %859 = vmatpush1.bf16.msra.mxu0 0
        %860 = vmatprep.subr.bf16.mxu0 0
        %861 = vmatpush1.bf16.msra.mxu0 0
        %862 = vmatprep.subr.bf16.mxu0 0
        %863 = vmatpush1.bf16.msra.mxu0 0
        %864 = vmatprep.subr.bf16.mxu0 0
        %865 = vmatpush1.bf16.msra.mxu0 0
        %866 = vmatprep.subr.bf16.mxu0 0
        %867 = vmatpush1.bf16.msra.mxu0 0
        %868 = vmatprep.subr.bf16.mxu0 0
        %869 = vmatpush1.bf16.msra.mxu0 0
        %870 = vmatprep.subr.bf16.mxu0 0
        %871 = vmatpush1.bf16.msra.mxu0 0
        %872 = vmatprep.subr.bf16.mxu0 0
        %873 = vmatpush1.bf16.msra.mxu0 0
        %874 = vmatprep.subr.bf16.mxu0 0
        %875 = vmatpush1.bf16.msra.mxu0 0
        %876 = vmatprep.subr.bf16.mxu0 0
        %877 = vmatpush1.bf16.msra.mxu0 0
        %878 = vmatprep.subr.bf16.mxu0 0
        %879 = vmatpush1.bf16.msra.mxu0 0
        %880 = vmatprep.subr.bf16.mxu0 0
        %881 = vmatpush1.bf16.msra.mxu0 0
        %882 = vmatprep.subr.bf16.mxu0 0
        %883 = vmatpush1.bf16.msra.mxu0 0
        %884 = vmatprep.subr.bf16.mxu0 0
        %885 = vmatpush1.bf16.msra.mxu0 0
        %886 = vmatprep.subr.bf16.mxu0 0
        %887 = vmatpush1.bf16.msra.mxu0 0
        %888 = vmatprep.mubr.bf16.mxu0 0
        %889 = vmatmul.mubr.bf16.gmra.mrb[0].mxu0 %v851
        %v890 = vpop.f32.mrb[0].mxu0
        %v891 = vadd.f32 0.0, %v890
        %v892 = vpop.f32.mrb[0].mxu0
        %v893 = vpop.f32.mrb[0].mxu0
        %v894 = vpop.f32.mrb[0].mxu0
        %895 = vdwg.mxu0
        %896 = vrot.lane.b32.xlu0 %v509, 64
        %v897 = vpop.permute.xlu0 %896
        %v899 = vsel %vm512, %v750, 0
        %v902 = vsel %vm756, %v897, 0
        %904 = vmatprep.subr.bf16.mxu0 0
        %905 = vmatpush1.bf16.msra.mxu0 %v902
        %906 = vmatprep.subr.bf16.mxu0 0
        %907 = vmatpush1.bf16.msra.mxu0 0
        %908 = vmatprep.subr.bf16.mxu0 0
        %909 = vmatpush1.bf16.msra.mxu0 0
        %910 = vmatprep.subr.bf16.mxu0 0
        %911 = vmatpush1.bf16.msra.mxu0 0
        %912 = vmatprep.subr.bf16.mxu0 0
        %913 = vmatpush1.bf16.msra.mxu0 0
        %914 = vmatprep.subr.bf16.mxu0 0
        %915 = vmatpush1.bf16.msra.mxu0 0
        %916 = vmatprep.subr.bf16.mxu0 0
        %917 = vmatpush1.bf16.msra.mxu0 0
        %918 = vmatprep.subr.bf16.mxu0 0
        %919 = vmatpush1.bf16.msra.mxu0 0
        %920 = vmatprep.subr.bf16.mxu0 0
        %921 = vmatpush1.bf16.msra.mxu0 0
        %922 = vmatprep.subr.bf16.mxu0 0
        %923 = vmatpush1.bf16.msra.mxu0 0
        %924 = vmatprep.subr.bf16.mxu0 0
        %925 = vmatpush1.bf16.msra.mxu0 0
        %926 = vmatprep.subr.bf16.mxu0 0
        %927 = vmatpush1.bf16.msra.mxu0 0
        %928 = vmatprep.subr.bf16.mxu0 0
        %929 = vmatpush1.bf16.msra.mxu0 0
        %930 = vmatprep.subr.bf16.mxu0 0
        %931 = vmatpush1.bf16.msra.mxu0 0
        %932 = vmatprep.subr.bf16.mxu0 0
        %933 = vmatpush1.bf16.msra.mxu0 0
        %934 = vmatprep.subr.bf16.mxu0 0
        %935 = vmatpush1.bf16.msra.mxu0 0
        %936 = vmatprep.mubr.bf16.mxu0 0
        %937 = vmatmul.mubr.bf16.gmra.mrb[0].mxu0 %v899
        %v938 = vpop.f32.mrb[0].mxu0
        %v939 = vadd.f32 0.0, %v938
        %v940 = vpop.f32.mrb[0].mxu0
        %v941 = vpop.f32.mrb[0].mxu0
        %v942 = vpop.f32.mrb[0].mxu0
        %943 = vdwg.mxu0
        %v944 = vpack.c.bf16 %v795, %v795
        %v945 = vpack.c.bf16 %v843, %v843
        %v946 = vpack.c.bf16 %v891, %v891
        %v947 = vpack.c.bf16 %v939, %v939
        %949 = vrot.lane.b32.xlu0 %v945, 8
        %v950 = vpop.permute.xlu0 %949
        %952 = vrot.lane.b32.xlu0 %v946, 16
        %v953 = vpop.permute.xlu0 %952
        %955 = vrot.lane.b32.xlu0 %v947, 24
        %v956 = vpop.permute.xlu0 %955
        %v959 = vsel %vm512, %v944, %v950
        %vm960 = vcmask 130048
        %v962 = vsel %vm960, %v959, %v953
        %vm963 = vcmask 195584
        %v965 = vsel %vm963, %v962, %v956
        %v966 = vld [vmem:[%s4] sm:$0xf]
        %v967 = vld [vmem:[%s4 + $0x4] sm:$0xf]
        %v968 = vld [vmem:[%s4 + $0x8] sm:$0xf]
        %v969 = vld [vmem:[%s4 + $0xc] sm:$0xf]
        %v970 = vld [vmem:[%s5] sm:$0x1]
        %v972 = vlaneseq
        %v973 = vshrl.u32 %v972, 7
        %v974 = vsub.s32 0, %v973
        %v975 = vrot.slane %v970, %v974
        %v981 = vunpack.c.l.b16 %v966
        %v982 = vunpack.c.l.b16 %v967
        %v983 = vunpack.c.l.b16 %v968
        %v984 = vunpack.c.l.b16 %v969
        %v985 = vpack.c.b16 %v982, %v981
        %v986 = vpack.c.b16 %v984, %v983
        %v989 = vsel %vm413, %v965, 0
        %991 = vmatprep.subr.bf16.mxu0 0
        %992 = vmatpush1.bf16.msra.mxu0 %v985
        %993 = vmatprep.subr.bf16.mxu0 0
        %994 = vmatpush1.bf16.msra.mxu0 %v986
        %995 = vmatprep.subr.bf16.mxu0 0
        %996 = vmatpush1.bf16.msra.mxu0 0
        %997 = vmatprep.subr.bf16.mxu0 0
        %998 = vmatpush1.bf16.msra.mxu0 0
        %999 = vmatprep.subr.bf16.mxu0 0
        %1000 = vmatpush1.bf16.msra.mxu0 0
        %1001 = vmatprep.subr.bf16.mxu0 0
        %1002 = vmatpush1.bf16.msra.mxu0 0
        %1003 = vmatprep.subr.bf16.mxu0 0
        %1004 = vmatpush1.bf16.msra.mxu0 0
        %1005 = vmatprep.subr.bf16.mxu0 0
        %1006 = vmatpush1.bf16.msra.mxu0 0
        %1007 = vmatprep.subr.bf16.mxu0 0
        %1008 = vmatpush1.bf16.msra.mxu0 0
        %1009 = vmatprep.subr.bf16.mxu0 0
        %1010 = vmatpush1.bf16.msra.mxu0 0
        %1011 = vmatprep.subr.bf16.mxu0 0
        %1012 = vmatpush1.bf16.msra.mxu0 0
        %1013 = vmatprep.subr.bf16.mxu0 0
        %1014 = vmatpush1.bf16.msra.mxu0 0
        %1015 = vmatprep.subr.bf16.mxu0 0
        %1016 = vmatpush1.bf16.msra.mxu0 0
        %1017 = vmatprep.subr.bf16.mxu0 0
        %1018 = vmatpush1.bf16.msra.mxu0 0
        %1019 = vmatprep.subr.bf16.mxu0 0
        %1020 = vmatpush1.bf16.msra.mxu0 0
        %1021 = vmatprep.subr.bf16.mxu0 0
        %1022 = vmatpush1.bf16.msra.mxu0 0
        %1023 = vmatprep.mubr.bf16.mxu0 0
        %1024 = vmatmul.mubr.bf16.gmra.mrb[0].mxu0 %v989
        %v1025 = vpop.f32.mrb[0].mxu0
        %v1026 = vadd.f32 %v975, %v1025
        %v1027 = vpop.f32.mrb[0].mxu0
        %v1028 = vpop.f32.mrb[0].mxu0
        %v1029 = vpop.f32.mrb[0].mxu0
        %1030 = vdwg.mxu0
        %v1031 = vadd.f32 %v410, %v1026
        %v1032 = vld [vmem:[%s6] sm:$0x1]
        %v1033 = vld [vmem:[%s7] sm:$0x1]
        %v1034 = vsel %vm413, %v1031, 0.0
        %1035 = vadd.xlane.f32.xlu0 %v1034
        %v1036 = vpop.xlane.xlu0 %1035
        %v1037 = vmul.f32 %v1036, %v417
        %v1038 = vsub.f32 %v1031, %v1037
        %v1039 = vmul.f32 %v1038, %v1038
        %v1040 = vsel %vm413, %v1039, 0.0
        %1041 = vadd.xlane.f32.xlu0 %v1040
        %v1042 = vpop.xlane.xlu0 %1041
        %v1043 = vmul.f32 %v1042, %v417
        %v1044 = vadd.f32 %v1043, 1e-05
        %v1045 = vrsqrt.pop %v1044
        %v1046 = vmul.f32 %v1038, %v1045
        %v1048 = vlaneseq
        %v1049 = vshrl.u32 %v1048, 7
        %v1050 = vsub.s32 0, %v1049
        %v1051 = vrot.slane %v1032, %v1050
        %v1053 = vmul.f32 %v1046, %v1051
        %v1055 = vlaneseq
        %v1056 = vshrl.u32 %v1055, 7
        %v1057 = vsub.s32 0, %v1056
        %v1058 = vrot.slane %v1033, %v1057
        %v1060 = vadd.f32 %v1053, %v1058
        %v1061 = vpack.c.bf16 %v1060, %v1060
        %v1062 = vld [vmem:[%s8] sm:$0xf]
        %v1063 = vld [vmem:[%s8 + $0x4] sm:$0xf]
        %v1064 = vld [vmem:[%s8 + $0x8] sm:$0xf]
        %v1065 = vld [vmem:[%s8 + $0xc] sm:$0xf]
        %v1066 = vld [vmem:[%s9] sm:$0x1]
        %v1068 = vlaneseq
        %v1069 = vshrl.u32 %v1068, 7
        %v1070 = vsub.s32 0, %v1069
        %v1071 = vrot.slane %v1066, %v1070
        %v1077 = vunpack.c.l.b16 %v1062
        %v1078 = vunpack.c.l.b16 %v1063
        %v1079 = vunpack.c.l.b16 %v1064
        %v1080 = vunpack.c.l.b16 %v1065
        %v1081 = vpack.c.b16 %v1078, %v1077
        %v1082 = vpack.c.b16 %v1080, %v1079
        %v1086 = vsel %vm413, %v1061, 0
        %1088 = vmatprep.subr.bf16.mxu0 0
        %1089 = vmatpush1.bf16.msra.mxu0 %v1081
        %1090 = vmatprep.subr.bf16.mxu0 0
        %1091 = vmatpush1.bf16.msra.mxu0 %v1082
        %1092 = vmatprep.subr.bf16.mxu0 0
        %1093 = vmatpush1.bf16.msra.mxu0 0
        %1094 = vmatprep.subr.bf16.mxu0 0
        %1095 = vmatpush1.bf16.msra.mxu0 0
        %1096 = vmatprep.subr.bf16.mxu0 0
        %1097 = vmatpush1.bf16.msra.mxu0 0
        %1098 = vmatprep.subr.bf16.mxu0 0
        %1099 = vmatpush1.bf16.msra.mxu0 0
        %1100 = vmatprep.subr.bf16.mxu0 0
        %1101 = vmatpush1.bf16.msra.mxu0 0
        %1102 = vmatprep.subr.bf16.mxu0 0
        %1103 = vmatpush1.bf16.msra.mxu0 0
        %1104 = vmatprep.subr.bf16.mxu0 0
        %1105 = vmatpush1.bf16.msra.mxu0 0
        %1106 = vmatprep.subr.bf16.mxu0 0
        %1107 = vmatpush1.bf16.msra.mxu0 0
        %1108 = vmatprep.subr.bf16.mxu0 0
        %1109 = vmatpush1.bf16.msra.mxu0 0
        %1110 = vmatprep.subr.bf16.mxu0 0
        %1111 = vmatpush1.bf16.msra.mxu0 0
        %1112 = vmatprep.subr.bf16.mxu0 0
        %1113 = vmatpush1.bf16.msra.mxu0 0
        %1114 = vmatprep.subr.bf16.mxu0 0
        %1115 = vmatpush1.bf16.msra.mxu0 0
        %1116 = vmatprep.subr.bf16.mxu0 0
        %1117 = vmatpush1.bf16.msra.mxu0 0
        %1118 = vmatprep.subr.bf16.mxu0 0
        %1119 = vmatpush1.bf16.msra.mxu0 0
        %1120 = vmatprep.mubr.bf16.mxu0 0
        %1121 = vmatmul.mubr.bf16.gmra.mrb[0].mxu0 %v1086
        %v1122 = vpop.f32.mrb[0].mxu0
        %v1123 = vadd.f32 %v1071, %v1122
        %v1124 = vpop.f32.mrb[0].mxu0
        %v1125 = vpop.f32.mrb[0].mxu0
        %v1126 = vpop.f32.mrb[0].mxu0
        %1127 = vdwg.mxu0
        %v1128 = vmul.f32 %v1123, 0.5
        %v1129 = vmul.f32 %v1123, 0.70710677
        %v1130 = verf.f32.pop %v1129
        %v1131 = vadd.f32 %v1130, 1.0
        %v1132 = vmul.f32 %v1128, %v1131
        %v1133 = vpack.c.bf16 %v1132, %v1132
        %v1134 = vld [vmem:[%s10] sm:$0xf]
        %v1135 = vld [vmem:[%s10 + $0x4] sm:$0xf]
        %v1136 = vld [vmem:[%s10 + $0x8] sm:$0xf]
        %v1137 = vld [vmem:[%s10 + $0xc] sm:$0xf]
        %v1138 = vld [vmem:[%s10 + $0x10] sm:$0xf]
        %v1139 = vld [vmem:[%s10 + $0x14] sm:$0xf]
        %v1140 = vld [vmem:[%s10 + $0x18] sm:$0xf]
        %v1141 = vld [vmem:[%s10 + $0x1c] sm:$0xf]
        %v1142 = vld [vmem:[%s10 + $0x20] sm:$0xf]
        %v1143 = vld [vmem:[%s10 + $0x24] sm:$0xf]
        %v1144 = vld [vmem:[%s10 + $0x28] sm:$0xf]
        %v1145 = vld [vmem:[%s10 + $0x2c] sm:$0xf]
        %v1146 = vld [vmem:[%s10 + $0x30] sm:$0xf]
        %v1147 = vld [vmem:[%s10 + $0x34] sm:$0xf]
        %v1148 = vld [vmem:[%s10 + $0x38] sm:$0xf]
        %v1149 = vld [vmem:[%s10 + $0x3c] sm:$0xf]
        %v1150 = vld [vmem:[%s11] sm:$0x1]
        %v1152 = vlaneseq
        %v1153 = vshrl.u32 %v1152, 7
        %v1154 = vsub.s32 0, %v1153
        %v1155 = vrot.slane %v1150, %v1154
        %v1173 = vunpack.c.l.b16 %v1134
        %v1174 = vunpack.c.l.b16 %v1135
        %v1175 = vunpack.c.l.b16 %v1136
        %v1176 = vunpack.c.l.b16 %v1137
        %v1177 = vunpack.c.l.b16 %v1138
        %v1178 = vunpack.c.l.b16 %v1139
        %v1179 = vunpack.c.l.b16 %v1140
        %v1180 = vunpack.c.l.b16 %v1141
        %v1181 = vunpack.c.l.b16 %v1142
        %v1182 = vunpack.c.l.b16 %v1143
        %v1183 = vunpack.c.l.b16 %v1144
        %v1184 = vunpack.c.l.b16 %v1145
        %v1185 = vunpack.c.l.b16 %v1146
        %v1186 = vunpack.c.l.b16 %v1147
        %v1187 = vunpack.c.l.b16 %v1148
        %v1188 = vunpack.c.l.b16 %v1149
        %v1189 = vpack.c.b16 %v1174, %v1173
        %v1190 = vpack.c.b16 %v1176, %v1175
        %v1191 = vpack.c.b16 %v1178, %v1177
        %v1192 = vpack.c.b16 %v1180, %v1179
        %v1193 = vpack.c.b16 %v1182, %v1181
        %v1194 = vpack.c.b16 %v1184, %v1183
        %v1195 = vpack.c.b16 %v1186, %v1185
        %v1196 = vpack.c.b16 %v1188, %v1187
        %1205 = vmatprep.subr.bf16.mxu0 0
        %1206 = vmatpush1.bf16.msra.mxu0 %v1189
        %1207 = vmatprep.subr.bf16.mxu0 0
        %1208 = vmatpush1.bf16.msra.mxu0 %v1190
        %1209 = vmatprep.subr.bf16.mxu0 0
        %1210 = vmatpush1.bf16.msra.mxu0 %v1191
        %1211 = vmatprep.subr.bf16.mxu0 0
        %1212 = vmatpush1.bf16.msra.mxu0 %v1192
        %1213 = vmatprep.subr.bf16.mxu0 0
        %1214 = vmatpush1.bf16.msra.mxu0 %v1193
        %1215 = vmatprep.subr.bf16.mxu0 0
        %1216 = vmatpush1.bf16.msra.mxu0 %v1194
        %1217 = vmatprep.subr.bf16.mxu0 0
        %1218 = vmatpush1.bf16.msra.mxu0 %v1195
        %1219 = vmatprep.subr.bf16.mxu0 0
        %1220 = vmatpush1.bf16.msra.mxu0 %v1196
        %1221 = vmatprep.subr.bf16.mxu0 0
        %1222 = vmatpush1.bf16.msra.mxu0 0
        %1223 = vmatprep.subr.bf16.mxu0 0
        %1224 = vmatpush1.bf16.msra.mxu0 0
        %1225 = vmatprep.subr.bf16.mxu0 0
        %1226 = vmatpush1.bf16.msra.mxu0 0
        %1227 = vmatprep.subr.bf16.mxu0 0
        %1228 = vmatpush1.bf16.msra.mxu0 0
        %1229 = vmatprep.subr.bf16.mxu0 0
        %1230 = vmatpush1.bf16.msra.mxu0 0
        %1231 = vmatprep.subr.bf16.mxu0 0
        %1232 = vmatpush1.bf16.msra.mxu0 0
        %1233 = vmatprep.subr.bf16.mxu0 0
        %1234 = vmatpush1.bf16.msra.mxu0 0
        %1235 = vmatprep.subr.bf16.mxu0 0
        %1236 = vmatpush1.bf16.msra.mxu0 0
        %1237 = vmatprep.mubr.bf16.mxu0 0
        %1238 = vmatmul.mubr.bf16.gmra.mrb[0].mxu0 %v1133
        %v1239 = vpop.f32.mrb[0].mxu0
        %v1240 = vadd.f32 %v1155, %v1239
        %v1241 = vpop.f32.mrb[0].mxu0
        %v1242 = vpop.f32.mrb[0].mxu0
        %v1243 = vpop.f32.mrb[0].mxu0
        %1244 = vdwg.mxu0
        %v1245 = vadd.f32 %v1031, %v1240
        %1246 = vst.msk [vmem:[%s404] sm:$0xff] %vm413, %v1245
        %s1247 = sand.u32 %s291, 1
        %s1248 = scalar_lea.sflag [#allocation3], %s1247
        %s1249 = sand.u32 %s291, 1
        %s1250 = smul.addr %s1249, 8
        %s1251 = scalar_lea.vmem [#allocation2], %s1250
        // Predicated region
        $region69: #{tpu_custom_call.1} parent=67 // pred_check
          %p1252 = pneg %p301
        $region70: #{tpu_custom_call.1} parent=67 // pred_check_branch
          %1254 = sbr.rel (%p1252) target = $region72
        $region71: #{tpu_custom_call.1} parent=67 // pred_region
          %s1256 = ssub.s32 128, 128
          %1257 = vsyncadd %s1248, %s1256
          %s1258 = smul.addr %s26, 128
          %s1259 = scalar_lea.hbm %s12, %s1258
          %s1261 = sshll.u32 %s1251, 4
          %s1262 = int_to_ptr.vmem [resolvable:$true] %s1261
          %1264 = dma.vmem_to_hbm [thread:$0]  %s1262, 128, %s1259, %s1248
        $region72: #{tpu_custom_call.1} parent=67 // pred_fallthru
          _
      $region68: #{tpu_custom_call.1} parent=5 // pred_fallthru
        _
      %p1265 = scmp.le.s32.totalorder 2, %s21
      // Predicated region
      $region73: #{tpu_custom_call.1} parent=5 // pred_check
        %p1266 = pneg %p1265
      $region74: #{tpu_custom_call.1} parent=5 // pred_check_branch
        %1268 = sbr.rel (%p1266) target = $region76
      $region75: #{tpu_custom_call.1} parent=5 // pred_region
        %s1269 = ssub.s32 %s21, 2
        // Predicated region
        $region77: #{tpu_custom_call.1} parent=75 // pred_check
          %p1270 = pneg %p307
        $region78: #{tpu_custom_call.1} parent=75 // pred_check_branch
          %1272 = sbr.rel (%p1270) target = $region80
        $region79: #{tpu_custom_call.1} parent=75 // pred_region
          %s1273 = sand.u32 %s292, 1
          %s1274 = scalar_lea.sflag [#allocation3], %s1273
          %s1275 = sand.u32 %s292, 1
          %s1276 = smul.addr %s1275, 8
          %s1277 = scalar_lea.vmem [#allocation2], %s1276
          %1278 = dma.done %s1274, 128
        $region80: #{tpu_custom_call.1} parent=75 // pred_fallthru
          _
      $region76: #{tpu_custom_call.1} parent=5 // pred_fallthru
        _
    $region6: #{tpu_custom_call.1} parent=1 // loop_footer
      %s25 = sadd.s32 1, %s21
    $region7: #{tpu_custom_call.1} parent=1 // loop_footer_branch
      %20 = sbr.rel target = $region3
    $region8: #{tpu_custom_call.1} parent=1 // loop_exit
      _
    %1279 = vsyncpa [#allocation3], 1
    %s1280 = scalar_lea.sflag [#allocation3], 1
    %1281 = vsyncpa %s1280, 1

</llo_original>
